<compile_context>
chip_gen: v7x
topology: tpu7x:2x2x1
jax: 0.10.0
libtpu: 0.0.40
codegen_flags: <defaults>
</compile_context>

<pallas_src>
import functools

import jax
import jax.numpy as jnp
import numpy as np
from jax.experimental import pallas as pl
from jax.experimental.pallas import tpu as pltpu


# ------------------------------ in-kernel helpers ------------------------------ #

def _layer_norm(x, gamma, beta, eps):
    mean = jnp.mean(x, axis=-1, keepdims=True)
    var = jnp.mean((x - mean) ** 2, axis=-1, keepdims=True)
    return (x - mean) * jax.lax.rsqrt(var + eps) * gamma + beta


# ------------------------------ fused decoder kernel ------------------------------ #

def _decoder_kernel(
        tgt_ref, mem_ref, qpos_ref, pos_ref, smask_ref, cmask_ref,
        sa_wq_ref, sa_bq_ref, sa_wk_ref, sa_bk_ref, sa_wv_ref, sa_bv_ref,
        sa_wo_ref, sa_bo_ref,
        ca_wq_ref, ca_bq_ref, ca_wk_ref, ca_bk_ref, ca_wv_ref, ca_bv_ref,
        ca_wo_ref, ca_bo_ref,
        ffn_w1_ref, ffn_b1_ref, ffn_w2_ref, ffn_b2_ref,
        ln_g_ref, ln_b_ref,
        o_ref, *, num_layers, H, Dh, eps):
    f32 = jnp.float32
    bf16 = jnp.bfloat16

    # Activations stay f32 (VPU/EUP math); matmul operands are cast to bf16 at
    # the point of use (native MXU rate on v5e/v6e/v7x), accumulation is f32.
    x = tgt_ref[...].astype(f32)                    # (B*Lq, D)
    qpos = qpos_ref[...].astype(f32)                # (B*Lq, D)

    # Block-diagonal additive masks (0 on same-batch blocks, -1e9 elsewhere):
    # one matmul per head covers every batch at once, mask restores per-batch
    # softmax.
    smask = smask_ref[...]                          # (B*Lq, B*Lq)
    cmask = cmask_ref[...]                          # (B*Lq, B*Lk)

    def ln(y, row):
        return _layer_norm(y, ln_g_ref[row:row + 1, :],
                           ln_b_ref[row:row + 1, :], eps)

    def mha(q, k_bf, v_bf, wo_ref, bo_ref, mask):
        """q: (Nq, D) f32 (scale pre-folded into Wq); k_bf/v_bf: (Nk, D) bf16."""
        q_bf = q.astype(bf16)
        heads = []
        for h in range(H):                          # H small & static
            sl = slice(h * Dh, (h + 1) * Dh)
            # scores = q_h @ k_h^T for ALL batches in one MXU push
            s = jax.lax.dot_general(q_bf[:, sl], k_bf[:, sl],
                                    (((1,), (1,)), ((), ())),
                                    preferred_element_type=f32)
            s = s + mask
            s = s - jnp.max(s, axis=-1, keepdims=True)
            p = jnp.exp(s)
            p = p * pl.reciprocal(jnp.sum(p, axis=-1, keepdims=True), approx=True)
            heads.append(jnp.dot(p.astype(bf16), v_bf[:, sl],
                                 preferred_element_type=f32))
        o = jnp.concatenate(heads, axis=-1).astype(bf16)            # (Nq, D)
        # ONE output projection instead of H per-head (Nq, Dh) @ (Dh, D) pushes
        return jnp.dot(o, wo_ref[...], preferred_element_type=f32) + bo_ref[...]

    # Cross-attention K/V projections are layer-invariant (identical cloned
    # weights, constant memory/pos) -> computed once, reused every layer.
    # TODO(synk): for trained checkpoints with distinct per-layer weights this
    #             hoist (and the single shared weight set) must move into the loop.
    mem = mem_ref[...].astype(f32)
    pos = pos_ref[...].astype(f32)
    ca_k = (jnp.dot((mem + pos).astype(bf16), ca_wk_ref[...],
                    preferred_element_type=f32) + ca_bk_ref[...]).astype(bf16)
    ca_v = (jnp.dot(mem.astype(bf16), ca_wv_ref[...],
                    preferred_element_type=f32) + ca_bv_ref[...]).astype(bf16)

    def layer_body(_, x):
        # -------------------- self attention --------------------
        q_in = (x + qpos).astype(bf16)
        q_proj = (jnp.dot(q_in, sa_wq_ref[...], preferred_element_type=f32)
                  + sa_bq_ref[...])                 # 1/sqrt(Dh) already folded in
        k_proj = (jnp.dot(q_in, sa_wk_ref[...], preferred_element_type=f32)
                  + sa_bk_ref[...]).astype(bf16)
        v_proj = (jnp.dot(x.astype(bf16), sa_wv_ref[...],
                          preferred_element_type=f32)
                  + sa_bv_ref[...]).astype(bf16)
        sa = mha(q_proj, k_proj, v_proj, sa_wo_ref, sa_bo_ref, smask)
        x = ln(x + sa, 0)

        # -------------------- cross attention --------------------
        q_proj = (jnp.dot((x + qpos).astype(bf16), ca_wq_ref[...],
                          preferred_element_type=f32) + ca_bq_ref[...])
        ca = mha(q_proj, ca_k, ca_v, ca_wo_ref, ca_bo_ref, cmask)
        x = ln(x + ca, 1)

        # -------------------- feed forward --------------------
        hid = jnp.maximum(
            jnp.dot(x.astype(bf16), ffn_w1_ref[...], preferred_element_type=f32)
            + ffn_b1_ref[...], 0.0)
        ff = (jnp.dot(hid.astype(bf16), ffn_w2_ref[...],
                      preferred_element_type=f32) + ffn_b2_ref[...])
        x = ln(x + ff, 2)
        return x

    x = jax.lax.fori_loop(0, num_layers, layer_body, x)
    x = ln(x, 3)                                    # final decoder LayerNorm
    # TODO(synk): with D=32 this is a masked partial store; becomes lane-dense
    #             once D is a multiple of 128 (real DETR d_model=256 still isn't).
    o_ref[...] = x.astype(o_ref.dtype)


# ------------------------------ host wrapper ------------------------------ #

_PARAM_ORDER = ("sa_wq", "sa_bq", "sa_wk", "sa_bk", "sa_wv", "sa_bv", "sa_wo", "sa_bo",
                "ca_wq", "ca_bq", "ca_wk", "ca_bk", "ca_wv", "ca_bv", "ca_wo", "ca_bo",
                "ffn_w1", "ffn_b1", "ffn_w2", "ffn_b2", "ln_g", "ln_b")


@functools.partial(jax.jit, static_argnames=("num_layers", "nhead"))
def transformer_decoder(tgt, memory, pos, query_pos, kparams, *, num_layers, nhead):
    L, B, D = tgt.shape
    S = memory.shape[0]

    def to2d(x, length):   # (len, B, D) -> (B*len, D) batch-major slab
        return jnp.transpose(x, (1, 0, 2)).reshape(B * length, D)

    # Block-diagonal additive masks built from static shapes only with numpy ->
    # baked into the program as compile-time constants (zero runtime cost).
    rq = np.arange(B * L) // L
    smask = np.where(rq[:, None] == rq[None, :], 0.0, -1e9).astype(np.float32)
    rk = np.arange(B * S) // S
    cmask = np.where(rq[:, None] == rk[None, :], 0.0, -1e9).astype(np.float32)

    args = (to2d(tgt, L), to2d(memory, S), to2d(query_pos, L), to2d(pos, S),
            smask, cmask) + tuple(kparams[k] for k in _PARAM_ORDER)

    kernel = functools.partial(_decoder_kernel, num_layers=num_layers,
                               H=nhead, Dh=D // nhead, eps=1e-5)
    vmem_spec = pl.BlockSpec(memory_space=pltpu.MemorySpace.VMEM)
    out2d = pl.pallas_call(
        kernel,
        out_shape=jax.ShapeDtypeStruct((B * L, D), tgt.dtype),
        in_specs=[vmem_spec] * len(args),
        out_specs=vmem_spec,
        compiler_params=pltpu.CompilerParams(vmem_limit_bytes=32 * 1024 * 1024),
        # TODO(synk): on v7x add a batch-parallel grid axis
        #             (dimension_semantics=("parallel",)) once B is large enough
        #             to amortize per-step overhead, so both TensorCores are used.
    )(*args)
    return out2d.reshape(B, L, D).transpose(1, 0, 2)   # back to (L, B, D)


# ------------------------------ pure-JAX reference ------------------------------ #

def reference_decoder(tgt, memory, pos, query_pos, p, *, num_layers, nhead):
    L, B, D = tgt.shape
    S = memory.shape[0]
    H, Dh = nhead, D // nhead
    scale = float(Dh) ** -0.5
    to2d = lambda x, n: jnp.transpose(x, (1, 0, 2)).reshape(B * n, D)
    x, mem = to2d(tgt, L), to2d(memory, S)
    qp, ps = to2d(query_pos, L), to2d(pos, S)

    def ln(y, row):
        m = y.mean(-1, keepdims=True)
        v = ((y - m) ** 2).mean(-1, keepdims=True)
        return (y - m) / jnp.sqrt(v + 1e-5) * p["ln_g"][row:row + 1] + p["ln_b"][row:row + 1]

    def mha(qpr, kpr, vpr, wo, bo, Lq, Lk):
        outs = []
        for b in range(B):
            q = qpr[b * Lq:(b + 1) * Lq].reshape(Lq, H, Dh)
            k = kpr[b * Lk:(b + 1) * Lk].reshape(Lk, H, Dh)
            v = vpr[b * Lk:(b + 1) * Lk].reshape(Lk, H, Dh)
            s = jnp.einsum("qhd,khd->hqk", q, k)
            a = jax.nn.softmax(s, axis=-1)
            outs.append(jnp.einsum("hqk,khd->qhd", a, v).reshape(Lq, D))
        return jnp.concatenate(outs, axis=0) @ wo + bo

    ca_k = (mem + ps) @ p["ca_wk"] + p["ca_bk"]
    ca_v = mem @ p["ca_wv"] + p["ca_bv"]
    for _ in range(num_layers):
        qi = x + qp
        sa = mha((qi @ p["sa_wq"] + p["sa_bq"]) * scale,
                 qi @ p["sa_wk"] + p["sa_bk"],
                 x @ p["sa_wv"] + p["sa_bv"],
                 p["sa_wo"], p["sa_bo"], L, L)
        x = ln(x + sa, 0)
        qpr = ((x + qp) @ p["ca_wq"] + p["ca_bq"]) * scale
        ca = mha(qpr, ca_k, ca_v, p["ca_wo"], p["ca_bo"], L, S)
        x = ln(x + ca, 1)
        h = jnp.maximum(x @ p["ffn_w1"] + p["ffn_b1"], 0.0)
        x = ln(x + h @ p["ffn_w2"] + p["ffn_b2"], 2)
    x = ln(x, 3)
    return x.reshape(B, L, D).transpose(1, 0, 2)


# ------------------------------ parameter init ------------------------------ #

def init_params(key, d_model, nhead, dim_ff):
    ks = jax.random.split(key, 22)
    s = 0.05
    w = lambda k, shape: s * jax.random.normal(k, shape, jnp.float32)
    b = lambda k, n: s * jax.random.normal(k, (1, n), jnp.float32)
    return {
        "sa_wq": w(ks[0], (d_model, d_model)), "sa_bq": b(ks[1], d_model),
        "sa_wk": w(ks[2], (d_model, d_model)), "sa_bk": b(ks[3], d_model),
        "sa_wv": w(ks[4], (d_model, d_model)), "sa_bv": b(ks[5], d_model),
        "sa_wo": w(ks[6], (d_model, d_model)), "sa_bo": b(ks[7], d_model),
        "ca_wq": w(ks[8], (d_model, d_model)), "ca_bq": b(ks[9], d_model),
        "ca_wk": w(ks[10], (d_model, d_model)), "ca_bk": b(ks[11], d_model),
        "ca_wv": w(ks[12], (d_model, d_model)), "ca_bv": b(ks[13], d_model),
        "ca_wo": w(ks[14], (d_model, d_model)), "ca_bo": b(ks[15], d_model),
        "ffn_w1": w(ks[16], (d_model, dim_ff)), "ffn_b1": b(ks[17], dim_ff),
        "ffn_w2": w(ks[18], (dim_ff, d_model)), "ffn_b2": b(ks[19], d_model),
        # rows 0..2: norm1..norm3 of the layer, row 3: final decoder norm
        "ln_g": 1.0 + s * jax.random.normal(ks[20], (4, d_model), jnp.float32),
        "ln_b": s * jax.random.normal(ks[21], (4, d_model), jnp.float32),
    }


def prepare_kernel_params(p, d_model, nhead):
    """One-time transform: fold 1/sqrt(Dh) into the Q weights/biases and cast
    MXU weight operands to bf16 (biases / LayerNorm params stay f32)."""
    scale = float(d_model // nhead) ** -0.5
    bf = lambda a: a.astype(jnp.bfloat16)
    kp = dict(p)
    kp["sa_wq"] = bf(p["sa_wq"] * scale)
    kp["sa_bq"] = p["sa_bq"] * scale
    kp["ca_wq"] = bf(p["ca_wq"] * scale)
    kp["ca_bq"] = p["ca_bq"] * scale
    for name in ("sa_wk", "sa_wv", "sa_wo", "ca_wk", "ca_wv", "ca_wo",
                 "ffn_w1", "ffn_w2"):
        kp[name] = bf(p[name])
    return kp


# ------------------------------------ main ------------------------------------ #

if __name__ == "__main__":
    d_model, nhead, dim_ff = 32, 4, 64
    num_layers, num_queries, mem_len, batch = 2, 8, 16, 2

    key = jax.random.PRNGKey(0)
    k_tgt, k_mem, k_pos, k_qpos, k_par = jax.random.split(key, 5)
    tgt = jax.random.normal(k_tgt, (num_queries, batch, d_model), jnp.float32)
    memory = jax.random.normal(k_mem, (mem_len, batch, d_model), jnp.float32)
    pos = jax.random.normal(k_pos, (mem_len, batch, d_model), jnp.float32)
    query_pos = jax.random.normal(k_qpos, (num_queries, batch, d_model), jnp.float32)

    params = init_params(k_par, d_model, nhead, dim_ff)
    kparams = prepare_kernel_params(params, d_model, nhead)   # once, outside jit

    out = transformer_decoder(tgt, memory, pos, query_pos, kparams,
                              num_layers=num_layers, nhead=nhead)
    out = jax.block_until_ready(out)

    ref = reference_decoder(tgt, memory, pos, query_pos, params,
                            num_layers=num_layers, nhead=nhead)
    assert out.shape == (num_queries, batch, d_model)
    assert bool(jnp.all(jnp.isfinite(out)))
    max_diff = float(jnp.max(jnp.abs(out - ref)))
    assert max_diff < 5e-2, f"mismatch vs reference: {max_diff}"
    print("KERNEL_OK")
</pallas_src>

<mosaic_0001>
module attributes {stable_mosaic.version = 11 : i64} {
  func.func @_decoder_kernel(%arg0: memref<16x32xf32, #tpu.memory_space<vmem>>, %arg1: memref<32x32xf32, #tpu.memory_space<vmem>>, %arg2: memref<16x32xf32, #tpu.memory_space<vmem>>, %arg3: memref<32x32xf32, #tpu.memory_space<vmem>>, %arg4: memref<16x16xf32, #tpu.memory_space<vmem>>, %arg5: memref<16x32xf32, #tpu.memory_space<vmem>>, %arg6: memref<32x32xbf16, #tpu.memory_space<vmem>>, %arg7: memref<1x32xf32, #tpu.memory_space<vmem>>, %arg8: memref<32x32xbf16, #tpu.memory_space<vmem>>, %arg9: memref<1x32xf32, #tpu.memory_space<vmem>>, %arg10: memref<32x32xbf16, #tpu.memory_space<vmem>>, %arg11: memref<1x32xf32, #tpu.memory_space<vmem>>, %arg12: memref<32x32xbf16, #tpu.memory_space<vmem>>, %arg13: memref<1x32xf32, #tpu.memory_space<vmem>>, %arg14: memref<32x32xbf16, #tpu.memory_space<vmem>>, %arg15: memref<1x32xf32, #tpu.memory_space<vmem>>, %arg16: memref<32x32xbf16, #tpu.memory_space<vmem>>, %arg17: memref<1x32xf32, #tpu.memory_space<vmem>>, %arg18: memref<32x32xbf16, #tpu.memory_space<vmem>>, %arg19: memref<1x32xf32, #tpu.memory_space<vmem>>, %arg20: memref<32x32xbf16, #tpu.memory_space<vmem>>, %arg21: memref<1x32xf32, #tpu.memory_space<vmem>>, %arg22: memref<32x64xbf16, #tpu.memory_space<vmem>>, %arg23: memref<1x64xf32, #tpu.memory_space<vmem>>, %arg24: memref<64x32xbf16, #tpu.memory_space<vmem>>, %arg25: memref<1x32xf32, #tpu.memory_space<vmem>>, %arg26: memref<4x32xf32, #tpu.memory_space<vmem>>, %arg27: memref<4x32xf32, #tpu.memory_space<vmem>>, %arg28: memref<16x32xf32, #tpu.memory_space<vmem>>) attributes {dimension_semantics = [], scalar_prefetch = 0 : i64, scratch_operands = 0 : i64, tpu.core_type = #tpu.core_type<tc>} {
    %c0 = arith.constant 0 : index
    %c0_0 = arith.constant 0 : index
    %0 = vector.load %arg0[%c0, %c0_0] : memref<16x32xf32, #tpu.memory_space<vmem>>, vector<16x32xf32>
    %c0_1 = arith.constant 0 : index
    %c0_2 = arith.constant 0 : index
    %1 = vector.load %arg2[%c0_1, %c0_2] : memref<16x32xf32, #tpu.memory_space<vmem>>, vector<16x32xf32>
    %c0_3 = arith.constant 0 : index
    %c0_4 = arith.constant 0 : index
    %2 = vector.load %arg4[%c0_3, %c0_4] : memref<16x16xf32, #tpu.memory_space<vmem>>, vector<16x16xf32>
    %c0_5 = arith.constant 0 : index
    %c0_6 = arith.constant 0 : index
    %3 = vector.load %arg5[%c0_5, %c0_6] : memref<16x32xf32, #tpu.memory_space<vmem>>, vector<16x32xf32>
    %c0_7 = arith.constant 0 : index
    %c0_8 = arith.constant 0 : index
    %4 = vector.load %arg1[%c0_7, %c0_8] : memref<32x32xf32, #tpu.memory_space<vmem>>, vector<32x32xf32>
    %c0_9 = arith.constant 0 : index
    %c0_10 = arith.constant 0 : index
    %5 = vector.load %arg3[%c0_9, %c0_10] : memref<32x32xf32, #tpu.memory_space<vmem>>, vector<32x32xf32>
    %6 = arith.addf %4, %5 : vector<32x32xf32>
    %7 = arith.truncf %6 : vector<32x32xf32> to vector<32x32xbf16>
    %c0_11 = arith.constant 0 : index
    %c0_12 = arith.constant 0 : index
    %8 = vector.load %arg16[%c0_11, %c0_12] : memref<32x32xbf16, #tpu.memory_space<vmem>>, vector<32x32xbf16>
    %cst = arith.constant dense<0.000000e+00> : vector<32x32xf32>
    %9 = tpu.matmul %7, %8, %cst {dimension_numbers = #tpu.dot_dimension_numbers<[1], [0], [0], [1], [0, 0, 1, 1], [], []>} : vector<32x32xbf16>, vector<32x32xbf16>, vector<32x32xf32> -> vector<32x32xf32>
    %c0_13 = arith.constant 0 : index
    %c0_14 = arith.constant 0 : index
    %10 = vector.load %arg17[%c0_13, %c0_14] : memref<1x32xf32, #tpu.memory_space<vmem>>, vector<1x32xf32>
    %11 = vector.broadcast %10 : vector<1x32xf32> to vector<32x32xf32>
    %12 = arith.addf %9, %11 : vector<32x32xf32>
    %13 = arith.truncf %12 : vector<32x32xf32> to vector<32x32xbf16>
    %14 = arith.truncf %4 : vector<32x32xf32> to vector<32x32xbf16>
    %c0_15 = arith.constant 0 : index
    %c0_16 = arith.constant 0 : index
    %15 = vector.load %arg18[%c0_15, %c0_16] : memref<32x32xbf16, #tpu.memory_space<vmem>>, vector<32x32xbf16>
    %cst_17 = arith.constant dense<0.000000e+00> : vector<32x32xf32>
    %16 = tpu.matmul %14, %15, %cst_17 {dimension_numbers = #tpu.dot_dimension_numbers<[1], [0], [0], [1], [0, 0, 1, 1], [], []>} : vector<32x32xbf16>, vector<32x32xbf16>, vector<32x32xf32> -> vector<32x32xf32>
    %c0_18 = arith.constant 0 : index
    %c0_19 = arith.constant 0 : index
    %17 = vector.load %arg19[%c0_18, %c0_19] : memref<1x32xf32, #tpu.memory_space<vmem>>, vector<1x32xf32>
    %18 = vector.broadcast %17 : vector<1x32xf32> to vector<32x32xf32>
    %19 = arith.addf %16, %18 : vector<32x32xf32>
    %20 = arith.truncf %19 : vector<32x32xf32> to vector<32x32xbf16>
    %c0_i32 = arith.constant 0 : i32
    %c2_i32 = arith.constant 2 : i32
    %21 = arith.addi %c0_i32, %c2_i32 : i32
    %c1_i32 = arith.constant 1 : i32
    %22 = scf.for %arg29 = %c0_i32 to %21 step %c1_i32 iter_args(%arg30 = %0) -> (vector<16x32xf32>)  : i32 {
      %48 = arith.addf %arg30, %1 : vector<16x32xf32>
      %49 = arith.truncf %48 : vector<16x32xf32> to vector<16x32xbf16>
      %c0_30 = arith.constant 0 : index
      %c0_31 = arith.constant 0 : index
      %50 = vector.load %arg6[%c0_30, %c0_31] : memref<32x32xbf16, #tpu.memory_space<vmem>>, vector<32x32xbf16>
      %cst_32 = arith.constant dense<0.000000e+00> : vector<16x32xf32>
      %51 = tpu.matmul %49, %50, %cst_32 {dimension_numbers = #tpu.dot_dimension_numbers<[1], [0], [0], [1], [0, 0, 1, 1], [], []>} : vector<16x32xbf16>, vector<32x32xbf16>, vector<16x32xf32> -> vector<16x32xf32>
      %c0_33 = arith.constant 0 : index
      %c0_34 = arith.constant 0 : index
      %52 = vector.load %arg7[%c0_33, %c0_34] : memref<1x32xf32, #tpu.memory_space<vmem>>, vector<1x32xf32>
      %53 = vector.broadcast %52 : vector<1x32xf32> to vector<16x32xf32>
      %54 = arith.addf %51, %53 : vector<16x32xf32>
      %c0_35 = arith.constant 0 : index
      %c0_36 = arith.constant 0 : index
      %55 = vector.load %arg8[%c0_35, %c0_36] : memref<32x32xbf16, #tpu.memory_space<vmem>>, vector<32x32xbf16>
      %cst_37 = arith.constant dense<0.000000e+00> : vector<16x32xf32>
      %56 = tpu.matmul %49, %55, %cst_37 {dimension_numbers = #tpu.dot_dimension_numbers<[1], [0], [0], [1], [0, 0, 1, 1], [], []>} : vector<16x32xbf16>, vector<32x32xbf16>, vector<16x32xf32> -> vector<16x32xf32>
      %c0_38 = arith.constant 0 : index
      %c0_39 = arith.constant 0 : index
      %57 = vector.load %arg9[%c0_38, %c0_39] : memref<1x32xf32, #tpu.memory_space<vmem>>, vector<1x32xf32>
      %58 = vector.broadcast %57 : vector<1x32xf32> to vector<16x32xf32>
      %59 = arith.addf %56, %58 : vector<16x32xf32>
      %60 = arith.truncf %59 : vector<16x32xf32> to vector<16x32xbf16>
      %61 = arith.truncf %arg30 : vector<16x32xf32> to vector<16x32xbf16>
      %c0_40 = arith.constant 0 : index
      %c0_41 = arith.constant 0 : index
      %62 = vector.load %arg10[%c0_40, %c0_41] : memref<32x32xbf16, #tpu.memory_space<vmem>>, vector<32x32xbf16>
      %cst_42 = arith.constant dense<0.000000e+00> : vector<16x32xf32>
      %63 = tpu.matmul %61, %62, %cst_42 {dimension_numbers = #tpu.dot_dimension_numbers<[1], [0], [0], [1], [0, 0, 1, 1], [], []>} : vector<16x32xbf16>, vector<32x32xbf16>, vector<16x32xf32> -> vector<16x32xf32>
      %c0_43 = arith.constant 0 : index
      %c0_44 = arith.constant 0 : index
      %64 = vector.load %arg11[%c0_43, %c0_44] : memref<1x32xf32, #tpu.memory_space<vmem>>, vector<1x32xf32>
      %65 = vector.broadcast %64 : vector<1x32xf32> to vector<16x32xf32>
      %66 = arith.addf %63, %65 : vector<16x32xf32>
      %67 = arith.truncf %66 : vector<16x32xf32> to vector<16x32xbf16>
      %68 = arith.truncf %54 : vector<16x32xf32> to vector<16x32xbf16>
      %69 = vector.extract_strided_slice %68 {offsets = [0, 0], sizes = [16, 8], strides = [1, 1]} : vector<16x32xbf16> to vector<16x8xbf16>
      %70 = vector.extract_strided_slice %60 {offsets = [0, 0], sizes = [16, 8], strides = [1, 1]} : vector<16x32xbf16> to vector<16x8xbf16>
      %cst_45 = arith.constant dense<0.000000e+00> : vector<16x16xf32>
      %71 = tpu.matmul %69, %70, %cst_45 {dimension_numbers = #tpu.dot_dimension_numbers<[1], [1], [0], [0], [0, 0, 1, 0], [], []>} : vector<16x8xbf16>, vector<16x8xbf16>, vector<16x16xf32> -> vector<16x16xf32>
      %72 = arith.addf %71, %2 : vector<16x16xf32>
      %cst_46 = arith.constant dense<0xFF800000> : vector<16xf32>
      %73 = vector.multi_reduction <maximumf>, %72, %cst_46 [1] : vector<16x16xf32> to vector<16xf32>
      %74 = vector.shape_cast %73 : vector<16xf32> to vector<16x1xf32>
      %75 = vector.broadcast %74 : vector<16x1xf32> to vector<16x16xf32>
      %76 = arith.subf %72, %75 : vector<16x16xf32>
      %77 = math.exp %76 : vector<16x16xf32>
      %cst_47 = arith.constant dense<0.000000e+00> : vector<16xf32>
      %78 = vector.multi_reduction <add>, %77, %cst_47 [1] : vector<16x16xf32> to vector<16xf32>
      %79 = vector.shape_cast %78 : vector<16xf32> to vector<16x1xf32>
      %80 = tpu.reciprocal %79 {approx = true} : vector<16x1xf32> -> vector<16x1xf32>
      %81 = vector.broadcast %80 : vector<16x1xf32> to vector<16x16xf32>
      %82 = arith.mulf %77, %81 : vector<16x16xf32>
      %83 = arith.truncf %82 : vector<16x16xf32> to vector<16x16xbf16>
      %84 = vector.extract_strided_slice %67 {offsets = [0, 0], sizes = [16, 8], strides = [1, 1]} : vector<16x32xbf16> to vector<16x8xbf16>
      %cst_48 = arith.constant dense<0.000000e+00> : vector<16x8xf32>
      %85 = tpu.matmul %83, %84, %cst_48 {dimension_numbers = #tpu.dot_dimension_numbers<[1], [0], [0], [1], [0, 0, 1, 1], [], []>} : vector<16x16xbf16>, vector<16x8xbf16>, vector<16x8xf32> -> vector<16x8xf32>
      %86 = vector.extract_strided_slice %68 {offsets = [0, 8], sizes = [16, 8], strides = [1, 1]} : vector<16x32xbf16> to vector<16x8xbf16>
      %87 = vector.extract_strided_slice %60 {offsets = [0, 8], sizes = [16, 8], strides = [1, 1]} : vector<16x32xbf16> to vector<16x8xbf16>
      %cst_49 = arith.constant dense<0.000000e+00> : vector<16x16xf32>
      %88 = tpu.matmul %86, %87, %cst_49 {dimension_numbers = #tpu.dot_dimension_numbers<[1], [1], [0], [0], [0, 0, 1, 0], [], []>} : vector<16x8xbf16>, vector<16x8xbf16>, vector<16x16xf32> -> vector<16x16xf32>
      %89 = arith.addf %88, %2 : vector<16x16xf32>
      %cst_50 = arith.constant dense<0xFF800000> : vector<16xf32>
      %90 = vector.multi_reduction <maximumf>, %89, %cst_50 [1] : vector<16x16xf32> to vector<16xf32>
      %91 = vector.shape_cast %90 : vector<16xf32> to vector<16x1xf32>
      %92 = vector.broadcast %91 : vector<16x1xf32> to vector<16x16xf32>
      %93 = arith.subf %89, %92 : vector<16x16xf32>
      %94 = math.exp %93 : vector<16x16xf32>
      %cst_51 = arith.constant dense<0.000000e+00> : vector<16xf32>
      %95 = vector.multi_reduction <add>, %94, %cst_51 [1] : vector<16x16xf32> to vector<16xf32>
      %96 = vector.shape_cast %95 : vector<16xf32> to vector<16x1xf32>
      %97 = tpu.reciprocal %96 {approx = true} : vector<16x1xf32> -> vector<16x1xf32>
      %98 = vector.broadcast %97 : vector<16x1xf32> to vector<16x16xf32>
      %99 = arith.mulf %94, %98 : vector<16x16xf32>
      %100 = arith.truncf %99 : vector<16x16xf32> to vector<16x16xbf16>
      %101 = vector.extract_strided_slice %67 {offsets = [0, 8], sizes = [16, 8], strides = [1, 1]} : vector<16x32xbf16> to vector<16x8xbf16>
      %cst_52 = arith.constant dense<0.000000e+00> : vector<16x8xf32>
      %102 = tpu.matmul %100, %101, %cst_52 {dimension_numbers = #tpu.dot_dimension_numbers<[1], [0], [0], [1], [0, 0, 1, 1], [], []>} : vector<16x16xbf16>, vector<16x8xbf16>, vector<16x8xf32> -> vector<16x8xf32>
      %103 = vector.extract_strided_slice %68 {offsets = [0, 16], sizes = [16, 8], strides = [1, 1]} : vector<16x32xbf16> to vector<16x8xbf16>
      %104 = vector.extract_strided_slice %60 {offsets = [0, 16], sizes = [16, 8], strides = [1, 1]} : vector<16x32xbf16> to vector<16x8xbf16>
      %cst_53 = arith.constant dense<0.000000e+00> : vector<16x16xf32>
      %105 = tpu.matmul %103, %104, %cst_53 {dimension_numbers = #tpu.dot_dimension_numbers<[1], [1], [0], [0], [0, 0, 1, 0], [], []>} : vector<16x8xbf16>, vector<16x8xbf16>, vector<16x16xf32> -> vector<16x16xf32>
      %106 = arith.addf %105, %2 : vector<16x16xf32>
      %cst_54 = arith.constant dense<0xFF800000> : vector<16xf32>
      %107 = vector.multi_reduction <maximumf>, %106, %cst_54 [1] : vector<16x16xf32> to vector<16xf32>
      %108 = vector.shape_cast %107 : vector<16xf32> to vector<16x1xf32>
      %109 = vector.broadcast %108 : vector<16x1xf32> to vector<16x16xf32>
      %110 = arith.subf %106, %109 : vector<16x16xf32>
      %111 = math.exp %110 : vector<16x16xf32>
      %cst_55 = arith.constant dense<0.000000e+00> : vector<16xf32>
      %112 = vector.multi_reduction <add>, %111, %cst_55 [1] : vector<16x16xf32> to vector<16xf32>
      %113 = vector.shape_cast %112 : vector<16xf32> to vector<16x1xf32>
      %114 = tpu.reciprocal %113 {approx = true} : vector<16x1xf32> -> vector<16x1xf32>
      %115 = vector.broadcast %114 : vector<16x1xf32> to vector<16x16xf32>
      %116 = arith.mulf %111, %115 : vector<16x16xf32>
      %117 = arith.truncf %116 : vector<16x16xf32> to vector<16x16xbf16>
      %118 = vector.extract_strided_slice %67 {offsets = [0, 16], sizes = [16, 8], strides = [1, 1]} : vector<16x32xbf16> to vector<16x8xbf16>
      %cst_56 = arith.constant dense<0.000000e+00> : vector<16x8xf32>
      %119 = tpu.matmul %117, %118, %cst_56 {dimension_numbers = #tpu.dot_dimension_numbers<[1], [0], [0], [1], [0, 0, 1, 1], [], []>} : vector<16x16xbf16>, vector<16x8xbf16>, vector<16x8xf32> -> vector<16x8xf32>
      %120 = vector.extract_strided_slice %68 {offsets = [0, 24], sizes = [16, 8], strides = [1, 1]} : vector<16x32xbf16> to vector<16x8xbf16>
      %121 = vector.extract_strided_slice %60 {offsets = [0, 24], sizes = [16, 8], strides = [1, 1]} : vector<16x32xbf16> to vector<16x8xbf16>
      %cst_57 = arith.constant dense<0.000000e+00> : vector<16x16xf32>
      %122 = tpu.matmul %120, %121, %cst_57 {dimension_numbers = #tpu.dot_dimension_numbers<[1], [1], [0], [0], [0, 0, 1, 0], [], []>} : vector<16x8xbf16>, vector<16x8xbf16>, vector<16x16xf32> -> vector<16x16xf32>
      %123 = arith.addf %122, %2 : vector<16x16xf32>
      %cst_58 = arith.constant dense<0xFF800000> : vector<16xf32>
      %124 = vector.multi_reduction <maximumf>, %123, %cst_58 [1] : vector<16x16xf32> to vector<16xf32>
      %125 = vector.shape_cast %124 : vector<16xf32> to vector<16x1xf32>
      %126 = vector.broadcast %125 : vector<16x1xf32> to vector<16x16xf32>
      %127 = arith.subf %123, %126 : vector<16x16xf32>
      %128 = math.exp %127 : vector<16x16xf32>
      %cst_59 = arith.constant dense<0.000000e+00> : vector<16xf32>
      %129 = vector.multi_reduction <add>, %128, %cst_59 [1] : vector<16x16xf32> to vector<16xf32>
      %130 = vector.shape_cast %129 : vector<16xf32> to vector<16x1xf32>
      %131 = tpu.reciprocal %130 {approx = true} : vector<16x1xf32> -> vector<16x1xf32>
      %132 = vector.broadcast %131 : vector<16x1xf32> to vector<16x16xf32>
      %133 = arith.mulf %128, %132 : vector<16x16xf32>
      %134 = arith.truncf %133 : vector<16x16xf32> to vector<16x16xbf16>
      %135 = vector.extract_strided_slice %67 {offsets = [0, 24], sizes = [16, 8], strides = [1, 1]} : vector<16x32xbf16> to vector<16x8xbf16>
      %cst_60 = arith.constant dense<0.000000e+00> : vector<16x8xf32>
      %136 = tpu.matmul %134, %135, %cst_60 {dimension_numbers = #tpu.dot_dimension_numbers<[1], [0], [0], [1], [0, 0, 1, 1], [], []>} : vector<16x16xbf16>, vector<16x8xbf16>, vector<16x8xf32> -> vector<16x8xf32>
      %137 = tpu.concatenate %85, %102, %119, %136 in 1 : vector<16x8xf32>, vector<16x8xf32>, vector<16x8xf32>, vector<16x8xf32> -> vector<16x32xf32>
      %138 = arith.truncf %137 : vector<16x32xf32> to vector<16x32xbf16>
      %c0_61 = arith.constant 0 : index
      %c0_62 = arith.constant 0 : index
      %139 = vector.load %arg12[%c0_61, %c0_62] : memref<32x32xbf16, #tpu.memory_space<vmem>>, vector<32x32xbf16>
      %cst_63 = arith.constant dense<0.000000e+00> : vector<16x32xf32>
      %140 = tpu.matmul %138, %139, %cst_63 {dimension_numbers = #tpu.dot_dimension_numbers<[1], [0], [0], [1], [0, 0, 1, 1], [], []>} : vector<16x32xbf16>, vector<32x32xbf16>, vector<16x32xf32> -> vector<16x32xf32>
      %c0_64 = arith.constant 0 : index
      %c0_65 = arith.constant 0 : index
      %141 = vector.load %arg13[%c0_64, %c0_65] : memref<1x32xf32, #tpu.memory_space<vmem>>, vector<1x32xf32>
      %142 = vector.broadcast %141 : vector<1x32xf32> to vector<16x32xf32>
      %143 = arith.addf %140, %142 : vector<16x32xf32>
      %144 = arith.addf %arg30, %143 : vector<16x32xf32>
      %c0_66 = arith.constant 0 : index
      %c0_67 = arith.constant 0 : index
      %145 = vector.load %arg26[%c0_66, %c0_67] : memref<4x32xf32, #tpu.memory_space<vmem>>, vector<1x32xf32>
      %c0_68 = arith.constant 0 : index
      %c0_69 = arith.constant 0 : index
      %146 = vector.load %arg27[%c0_68, %c0_69] : memref<4x32xf32, #tpu.memory_space<vmem>>, vector<1x32xf32>
      %cst_70 = arith.constant dense<0.000000e+00> : vector<16xf32>
      %147 = vector.multi_reduction <add>, %144, %cst_70 [1] : vector<16x32xf32> to vector<16xf32>
      %148 = vector.shape_cast %147 : vector<16xf32> to vector<16x1xf32>
      %cst_71 = arith.constant 3.200000e+01 : f32
      %149 = vector.broadcast %cst_71 : f32 to vector<16x1xf32>
      %150 = arith.divf %148, %149 : vector<16x1xf32>
      %151 = vector.broadcast %150 : vector<16x1xf32> to vector<16x32xf32>
      %152 = arith.subf %144, %151 : vector<16x32xf32>
      %153 = arith.mulf %152, %152 : vector<16x32xf32>
      %cst_72 = arith.constant dense<0.000000e+00> : vector<16xf32>
      %154 = vector.multi_reduction <add>, %153, %cst_72 [1] : vector<16x32xf32> to vector<16xf32>
      %155 = vector.shape_cast %154 : vector<16xf32> to vector<16x1xf32>
      %cst_73 = arith.constant 3.200000e+01 : f32
      %156 = vector.broadcast %cst_73 : f32 to vector<16x1xf32>
      %157 = arith.divf %155, %156 : vector<16x1xf32>
      %158 = vector.broadcast %150 : vector<16x1xf32> to vector<16x32xf32>
      %159 = arith.subf %144, %158 : vector<16x32xf32>
      %cst_74 = arith.constant 9.99999974E-6 : f32
      %160 = vector.broadcast %cst_74 : f32 to vector<16x1xf32>
      %161 = arith.addf %157, %160 : vector<16x1xf32>
      %162 = math.rsqrt %161 : vector<16x1xf32>
      %163 = vector.broadcast %162 : vector<16x1xf32> to vector<16x32xf32>
      %164 = arith.mulf %159, %163 : vector<16x32xf32>
      %165 = vector.broadcast %145 : vector<1x32xf32> to vector<16x32xf32>
      %166 = arith.mulf %164, %165 : vector<16x32xf32>
      %167 = vector.broadcast %146 : vector<1x32xf32> to vector<16x32xf32>
      %168 = arith.addf %166, %167 : vector<16x32xf32>
      %169 = arith.addf %168, %1 : vector<16x32xf32>
      %170 = arith.truncf %169 : vector<16x32xf32> to vector<16x32xbf16>
      %c0_75 = arith.constant 0 : index
      %c0_76 = arith.constant 0 : index
      %171 = vector.load %arg14[%c0_75, %c0_76] : memref<32x32xbf16, #tpu.memory_space<vmem>>, vector<32x32xbf16>
      %cst_77 = arith.constant dense<0.000000e+00> : vector<16x32xf32>
      %172 = tpu.matmul %170, %171, %cst_77 {dimension_numbers = #tpu.dot_dimension_numbers<[1], [0], [0], [1], [0, 0, 1, 1], [], []>} : vector<16x32xbf16>, vector<32x32xbf16>, vector<16x32xf32> -> vector<16x32xf32>
      %c0_78 = arith.constant 0 : index
      %c0_79 = arith.constant 0 : index
      %173 = vector.load %arg15[%c0_78, %c0_79] : memref<1x32xf32, #tpu.memory_space<vmem>>, vector<1x32xf32>
      %174 = vector.broadcast %173 : vector<1x32xf32> to vector<16x32xf32>
      %175 = arith.addf %172, %174 : vector<16x32xf32>
      %176 = arith.truncf %175 : vector<16x32xf32> to vector<16x32xbf16>
      %177 = vector.extract_strided_slice %176 {offsets = [0, 0], sizes = [16, 8], strides = [1, 1]} : vector<16x32xbf16> to vector<16x8xbf16>
      %178 = vector.extract_strided_slice %13 {offsets = [0, 0], sizes = [32, 8], strides = [1, 1]} : vector<32x32xbf16> to vector<32x8xbf16>
      %cst_80 = arith.constant dense<0.000000e+00> : vector<16x32xf32>
      %179 = tpu.matmul %177, %178, %cst_80 {dimension_numbers = #tpu.dot_dimension_numbers<[1], [1], [0], [0], [0, 0, 1, 0], [], []>} : vector<16x8xbf16>, vector<32x8xbf16>, vector<16x32xf32> -> vector<16x32xf32>
      %180 = arith.addf %179, %3 : vector<16x32xf32>
      %cst_81 = arith.constant dense<0xFF800000> : vector<16xf32>
      %181 = vector.multi_reduction <maximumf>, %180, %cst_81 [1] : vector<16x32xf32> to vector<16xf32>
      %182 = vector.shape_cast %181 : vector<16xf32> to vector<16x1xf32>
      %183 = vector.broadcast %182 : vector<16x1xf32> to vector<16x32xf32>
      %184 = arith.subf %180, %183 : vector<16x32xf32>
      %185 = math.exp %184 : vector<16x32xf32>
      %cst_82 = arith.constant dense<0.000000e+00> : vector<16xf32>
      %186 = vector.multi_reduction <add>, %185, %cst_82 [1] : vector<16x32xf32> to vector<16xf32>
      %187 = vector.shape_cast %186 : vector<16xf32> to vector<16x1xf32>
      %188 = tpu.reciprocal %187 {approx = true} : vector<16x1xf32> -> vector<16x1xf32>
      %189 = vector.broadcast %188 : vector<16x1xf32> to vector<16x32xf32>
      %190 = arith.mulf %185, %189 : vector<16x32xf32>
      %191 = arith.truncf %190 : vector<16x32xf32> to vector<16x32xbf16>
      %192 = vector.extract_strided_slice %20 {offsets = [0, 0], sizes = [32, 8], strides = [1, 1]} : vector<32x32xbf16> to vector<32x8xbf16>
      %cst_83 = arith.constant dense<0.000000e+00> : vector<16x8xf32>
      %193 = tpu.matmul %191, %192, %cst_83 {dimension_numbers = #tpu.dot_dimension_numbers<[1], [0], [0], [1], [0, 0, 1, 1], [], []>} : vector<16x32xbf16>, vector<32x8xbf16>, vector<16x8xf32> -> vector<16x8xf32>
      %194 = vector.extract_strided_slice %176 {offsets = [0, 8], sizes = [16, 8], strides = [1, 1]} : vector<16x32xbf16> to vector<16x8xbf16>
      %195 = vector.extract_strided_slice %13 {offsets = [0, 8], sizes = [32, 8], strides = [1, 1]} : vector<32x32xbf16> to vector<32x8xbf16>
      %cst_84 = arith.constant dense<0.000000e+00> : vector<16x32xf32>
      %196 = tpu.matmul %194, %195, %cst_84 {dimension_numbers = #tpu.dot_dimension_numbers<[1], [1], [0], [0], [0, 0, 1, 0], [], []>} : vector<16x8xbf16>, vector<32x8xbf16>, vector<16x32xf32> -> vector<16x32xf32>
      %197 = arith.addf %196, %3 : vector<16x32xf32>
      %cst_85 = arith.constant dense<0xFF800000> : vector<16xf32>
      %198 = vector.multi_reduction <maximumf>, %197, %cst_85 [1] : vector<16x32xf32> to vector<16xf32>
      %199 = vector.shape_cast %198 : vector<16xf32> to vector<16x1xf32>
      %200 = vector.broadcast %199 : vector<16x1xf32> to vector<16x32xf32>
      %201 = arith.subf %197, %200 : vector<16x32xf32>
      %202 = math.exp %201 : vector<16x32xf32>
      %cst_86 = arith.constant dense<0.000000e+00> : vector<16xf32>
      %203 = vector.multi_reduction <add>, %202, %cst_86 [1] : vector<16x32xf32> to vector<16xf32>
      %204 = vector.shape_cast %203 : vector<16xf32> to vector<16x1xf32>
      %205 = tpu.reciprocal %204 {approx = true} : vector<16x1xf32> -> vector<16x1xf32>
      %206 = vector.broadcast %205 : vector<16x1xf32> to vector<16x32xf32>
      %207 = arith.mulf %202, %206 : vector<16x32xf32>
      %208 = arith.truncf %207 : vector<16x32xf32> to vector<16x32xbf16>
      %209 = vector.extract_strided_slice %20 {offsets = [0, 8], sizes = [32, 8], strides = [1, 1]} : vector<32x32xbf16> to vector<32x8xbf16>
      %cst_87 = arith.constant dense<0.000000e+00> : vector<16x8xf32>
      %210 = tpu.matmul %208, %209, %cst_87 {dimension_numbers = #tpu.dot_dimension_numbers<[1], [0], [0], [1], [0, 0, 1, 1], [], []>} : vector<16x32xbf16>, vector<32x8xbf16>, vector<16x8xf32> -> vector<16x8xf32>
      %211 = vector.extract_strided_slice %176 {offsets = [0, 16], sizes = [16, 8], strides = [1, 1]} : vector<16x32xbf16> to vector<16x8xbf16>
      %212 = vector.extract_strided_slice %13 {offsets = [0, 16], sizes = [32, 8], strides = [1, 1]} : vector<32x32xbf16> to vector<32x8xbf16>
      %cst_88 = arith.constant dense<0.000000e+00> : vector<16x32xf32>
      %213 = tpu.matmul %211, %212, %cst_88 {dimension_numbers = #tpu.dot_dimension_numbers<[1], [1], [0], [0], [0, 0, 1, 0], [], []>} : vector<16x8xbf16>, vector<32x8xbf16>, vector<16x32xf32> -> vector<16x32xf32>
      %214 = arith.addf %213, %3 : vector<16x32xf32>
      %cst_89 = arith.constant dense<0xFF800000> : vector<16xf32>
      %215 = vector.multi_reduction <maximumf>, %214, %cst_89 [1] : vector<16x32xf32> to vector<16xf32>
      %216 = vector.shape_cast %215 : vector<16xf32> to vector<16x1xf32>
      %217 = vector.broadcast %216 : vector<16x1xf32> to vector<16x32xf32>
      %218 = arith.subf %214, %217 : vector<16x32xf32>
      %219 = math.exp %218 : vector<16x32xf32>
      %cst_90 = arith.constant dense<0.000000e+00> : vector<16xf32>
      %220 = vector.multi_reduction <add>, %219, %cst_90 [1] : vector<16x32xf32> to vector<16xf32>
      %221 = vector.shape_cast %220 : vector<16xf32> to vector<16x1xf32>
      %222 = tpu.reciprocal %221 {approx = true} : vector<16x1xf32> -> vector<16x1xf32>
      %223 = vector.broadcast %222 : vector<16x1xf32> to vector<16x32xf32>
      %224 = arith.mulf %219, %223 : vector<16x32xf32>
      %225 = arith.truncf %224 : vector<16x32xf32> to vector<16x32xbf16>
      %226 = vector.extract_strided_slice %20 {offsets = [0, 16], sizes = [32, 8], strides = [1, 1]} : vector<32x32xbf16> to vector<32x8xbf16>
      %cst_91 = arith.constant dense<0.000000e+00> : vector<16x8xf32>
      %227 = tpu.matmul %225, %226, %cst_91 {dimension_numbers = #tpu.dot_dimension_numbers<[1], [0], [0], [1], [0, 0, 1, 1], [], []>} : vector<16x32xbf16>, vector<32x8xbf16>, vector<16x8xf32> -> vector<16x8xf32>
      %228 = vector.extract_strided_slice %176 {offsets = [0, 24], sizes = [16, 8], strides = [1, 1]} : vector<16x32xbf16> to vector<16x8xbf16>
      %229 = vector.extract_strided_slice %13 {offsets = [0, 24], sizes = [32, 8], strides = [1, 1]} : vector<32x32xbf16> to vector<32x8xbf16>
      %cst_92 = arith.constant dense<0.000000e+00> : vector<16x32xf32>
      %230 = tpu.matmul %228, %229, %cst_92 {dimension_numbers = #tpu.dot_dimension_numbers<[1], [1], [0], [0], [0, 0, 1, 0], [], []>} : vector<16x8xbf16>, vector<32x8xbf16>, vector<16x32xf32> -> vector<16x32xf32>
      %231 = arith.addf %230, %3 : vector<16x32xf32>
      %cst_93 = arith.constant dense<0xFF800000> : vector<16xf32>
      %232 = vector.multi_reduction <maximumf>, %231, %cst_93 [1] : vector<16x32xf32> to vector<16xf32>
      %233 = vector.shape_cast %232 : vector<16xf32> to vector<16x1xf32>
      %234 = vector.broadcast %233 : vector<16x1xf32> to vector<16x32xf32>
      %235 = arith.subf %231, %234 : vector<16x32xf32>
      %236 = math.exp %235 : vector<16x32xf32>
      %cst_94 = arith.constant dense<0.000000e+00> : vector<16xf32>
      %237 = vector.multi_reduction <add>, %236, %cst_94 [1] : vector<16x32xf32> to vector<16xf32>
      %238 = vector.shape_cast %237 : vector<16xf32> to vector<16x1xf32>
      %239 = tpu.reciprocal %238 {approx = true} : vector<16x1xf32> -> vector<16x1xf32>
      %240 = vector.broadcast %239 : vector<16x1xf32> to vector<16x32xf32>
      %241 = arith.mulf %236, %240 : vector<16x32xf32>
      %242 = arith.truncf %241 : vector<16x32xf32> to vector<16x32xbf16>
      %243 = vector.extract_strided_slice %20 {offsets = [0, 24], sizes = [32, 8], strides = [1, 1]} : vector<32x32xbf16> to vector<32x8xbf16>
      %cst_95 = arith.constant dense<0.000000e+00> : vector<16x8xf32>
      %244 = tpu.matmul %242, %243, %cst_95 {dimension_numbers = #tpu.dot_dimension_numbers<[1], [0], [0], [1], [0, 0, 1, 1], [], []>} : vector<16x32xbf16>, vector<32x8xbf16>, vector<16x8xf32> -> vector<16x8xf32>
      %245 = tpu.concatenate %193, %210, %227, %244 in 1 : vector<16x8xf32>, vector<16x8xf32>, vector<16x8xf32>, vector<16x8xf32> -> vector<16x32xf32>
      %246 = arith.truncf %245 : vector<16x32xf32> to vector<16x32xbf16>
      %c0_96 = arith.constant 0 : index
      %c0_97 = arith.constant 0 : index
      %247 = vector.load %arg20[%c0_96, %c0_97] : memref<32x32xbf16, #tpu.memory_space<vmem>>, vector<32x32xbf16>
      %cst_98 = arith.constant dense<0.000000e+00> : vector<16x32xf32>
      %248 = tpu.matmul %246, %247, %cst_98 {dimension_numbers = #tpu.dot_dimension_numbers<[1], [0], [0], [1], [0, 0, 1, 1], [], []>} : vector<16x32xbf16>, vector<32x32xbf16>, vector<16x32xf32> -> vector<16x32xf32>
      %c0_99 = arith.constant 0 : index
      %c0_100 = arith.constant 0 : index
      %249 = vector.load %arg21[%c0_99, %c0_100] : memref<1x32xf32, #tpu.memory_space<vmem>>, vector<1x32xf32>
      %250 = vector.broadcast %249 : vector<1x32xf32> to vector<16x32xf32>
      %251 = arith.addf %248, %250 : vector<16x32xf32>
      %252 = arith.addf %168, %251 : vector<16x32xf32>
      %c1 = arith.constant 1 : index
      %c0_101 = arith.constant 0 : index
      %253 = vector.load %arg26[%c1, %c0_101] : memref<4x32xf32, #tpu.memory_space<vmem>>, vector<1x32xf32>
      %c1_102 = arith.constant 1 : index
      %c0_103 = arith.constant 0 : index
      %254 = vector.load %arg27[%c1_102, %c0_103] : memref<4x32xf32, #tpu.memory_space<vmem>>, vector<1x32xf32>
      %cst_104 = arith.constant dense<0.000000e+00> : vector<16xf32>
      %255 = vector.multi_reduction <add>, %252, %cst_104 [1] : vector<16x32xf32> to vector<16xf32>
      %256 = vector.shape_cast %255 : vector<16xf32> to vector<16x1xf32>
      %cst_105 = arith.constant 3.200000e+01 : f32
      %257 = vector.broadcast %cst_105 : f32 to vector<16x1xf32>
      %258 = arith.divf %256, %257 : vector<16x1xf32>
      %259 = vector.broadcast %258 : vector<16x1xf32> to vector<16x32xf32>
      %260 = arith.subf %252, %259 : vector<16x32xf32>
      %261 = arith.mulf %260, %260 : vector<16x32xf32>
      %cst_106 = arith.constant dense<0.000000e+00> : vector<16xf32>
      %262 = vector.multi_reduction <add>, %261, %cst_106 [1] : vector<16x32xf32> to vector<16xf32>
      %263 = vector.shape_cast %262 : vector<16xf32> to vector<16x1xf32>
      %cst_107 = arith.constant 3.200000e+01 : f32
      %264 = vector.broadcast %cst_107 : f32 to vector<16x1xf32>
      %265 = arith.divf %263, %264 : vector<16x1xf32>
      %266 = vector.broadcast %258 : vector<16x1xf32> to vector<16x32xf32>
      %267 = arith.subf %252, %266 : vector<16x32xf32>
      %cst_108 = arith.constant 9.99999974E-6 : f32
      %268 = vector.broadcast %cst_108 : f32 to vector<16x1xf32>
      %269 = arith.addf %265, %268 : vector<16x1xf32>
      %270 = math.rsqrt %269 : vector<16x1xf32>
      %271 = vector.broadcast %270 : vector<16x1xf32> to vector<16x32xf32>
      %272 = arith.mulf %267, %271 : vector<16x32xf32>
      %273 = vector.broadcast %253 : vector<1x32xf32> to vector<16x32xf32>
      %274 = arith.mulf %272, %273 : vector<16x32xf32>
      %275 = vector.broadcast %254 : vector<1x32xf32> to vector<16x32xf32>
      %276 = arith.addf %274, %275 : vector<16x32xf32>
      %277 = arith.truncf %276 : vector<16x32xf32> to vector<16x32xbf16>
      %c0_109 = arith.constant 0 : index
      %c0_110 = arith.constant 0 : index
      %278 = vector.load %arg22[%c0_109, %c0_110] : memref<32x64xbf16, #tpu.memory_space<vmem>>, vector<32x64xbf16>
      %cst_111 = arith.constant dense<0.000000e+00> : vector<16x64xf32>
      %279 = tpu.matmul %277, %278, %cst_111 {dimension_numbers = #tpu.dot_dimension_numbers<[1], [0], [0], [1], [0, 0, 1, 1], [], []>} : vector<16x32xbf16>, vector<32x64xbf16>, vector<16x64xf32> -> vector<16x64xf32>
      %c0_112 = arith.constant 0 : index
      %c0_113 = arith.constant 0 : index
      %280 = vector.load %arg23[%c0_112, %c0_113] : memref<1x64xf32, #tpu.memory_space<vmem>>, vector<1x64xf32>
      %281 = vector.broadcast %280 : vector<1x64xf32> to vector<16x64xf32>
      %282 = arith.addf %279, %281 : vector<16x64xf32>
      %cst_114 = arith.constant 0.000000e+00 : f32
      %283 = vector.broadcast %cst_114 : f32 to vector<16x64xf32>
      %284 = arith.maximumf %282, %283 : vector<16x64xf32>
      %285 = arith.truncf %284 : vector<16x64xf32> to vector<16x64xbf16>
      %c0_115 = arith.constant 0 : index
      %c0_116 = arith.constant 0 : index
      %286 = vector.load %arg24[%c0_115, %c0_116] : memref<64x32xbf16, #tpu.memory_space<vmem>>, vector<64x32xbf16>
      %cst_117 = arith.constant dense<0.000000e+00> : vector<16x32xf32>
      %287 = tpu.matmul %285, %286, %cst_117 {dimension_numbers = #tpu.dot_dimension_numbers<[1], [0], [0], [1], [0, 0, 1, 1], [], []>} : vector<16x64xbf16>, vector<64x32xbf16>, vector<16x32xf32> -> vector<16x32xf32>
      %c0_118 = arith.constant 0 : index
      %c0_119 = arith.constant 0 : index
      %288 = vector.load %arg25[%c0_118, %c0_119] : memref<1x32xf32, #tpu.memory_space<vmem>>, vector<1x32xf32>
      %289 = vector.broadcast %288 : vector<1x32xf32> to vector<16x32xf32>
      %290 = arith.addf %287, %289 : vector<16x32xf32>
      %291 = arith.addf %276, %290 : vector<16x32xf32>
      %c2 = arith.constant 2 : index
      %c0_120 = arith.constant 0 : index
      %292 = vector.load %arg26[%c2, %c0_120] : memref<4x32xf32, #tpu.memory_space<vmem>>, vector<1x32xf32>
      %c2_121 = arith.constant 2 : index
      %c0_122 = arith.constant 0 : index
      %293 = vector.load %arg27[%c2_121, %c0_122] : memref<4x32xf32, #tpu.memory_space<vmem>>, vector<1x32xf32>
      %cst_123 = arith.constant dense<0.000000e+00> : vector<16xf32>
      %294 = vector.multi_reduction <add>, %291, %cst_123 [1] : vector<16x32xf32> to vector<16xf32>
      %295 = vector.shape_cast %294 : vector<16xf32> to vector<16x1xf32>
      %cst_124 = arith.constant 3.200000e+01 : f32
      %296 = vector.broadcast %cst_124 : f32 to vector<16x1xf32>
      %297 = arith.divf %295, %296 : vector<16x1xf32>
      %298 = vector.broadcast %297 : vector<16x1xf32> to vector<16x32xf32>
      %299 = arith.subf %291, %298 : vector<16x32xf32>
      %300 = arith.mulf %299, %299 : vector<16x32xf32>
      %cst_125 = arith.constant dense<0.000000e+00> : vector<16xf32>
      %301 = vector.multi_reduction <add>, %300, %cst_125 [1] : vector<16x32xf32> to vector<16xf32>
      %302 = vector.shape_cast %301 : vector<16xf32> to vector<16x1xf32>
      %cst_126 = arith.constant 3.200000e+01 : f32
      %303 = vector.broadcast %cst_126 : f32 to vector<16x1xf32>
      %304 = arith.divf %302, %303 : vector<16x1xf32>
      %305 = vector.broadcast %297 : vector<16x1xf32> to vector<16x32xf32>
      %306 = arith.subf %291, %305 : vector<16x32xf32>
      %cst_127 = arith.constant 9.99999974E-6 : f32
      %307 = vector.broadcast %cst_127 : f32 to vector<16x1xf32>
      %308 = arith.addf %304, %307 : vector<16x1xf32>
      %309 = math.rsqrt %308 : vector<16x1xf32>
      %310 = vector.broadcast %309 : vector<16x1xf32> to vector<16x32xf32>
      %311 = arith.mulf %306, %310 : vector<16x32xf32>
      %312 = vector.broadcast %292 : vector<1x32xf32> to vector<16x32xf32>
      %313 = arith.mulf %311, %312 : vector<16x32xf32>
      %314 = vector.broadcast %293 : vector<1x32xf32> to vector<16x32xf32>
      %315 = arith.addf %313, %314 : vector<16x32xf32>
      scf.yield %315 : vector<16x32xf32>
    }
    %c3 = arith.constant 3 : index
    %c0_20 = arith.constant 0 : index
    %23 = vector.load %arg26[%c3, %c0_20] : memref<4x32xf32, #tpu.memory_space<vmem>>, vector<1x32xf32>
    %c3_21 = arith.constant 3 : index
    %c0_22 = arith.constant 0 : index
    %24 = vector.load %arg27[%c3_21, %c0_22] : memref<4x32xf32, #tpu.memory_space<vmem>>, vector<1x32xf32>
    %cst_23 = arith.constant dense<0.000000e+00> : vector<16xf32>
    %25 = vector.multi_reduction <add>, %22, %cst_23 [1] : vector<16x32xf32> to vector<16xf32>
    %26 = vector.shape_cast %25 : vector<16xf32> to vector<16x1xf32>
    %cst_24 = arith.constant 3.200000e+01 : f32
    %27 = vector.broadcast %cst_24 : f32 to vector<16x1xf32>
    %28 = arith.divf %26, %27 : vector<16x1xf32>
    %29 = vector.broadcast %28 : vector<16x1xf32> to vector<16x32xf32>
    %30 = arith.subf %22, %29 : vector<16x32xf32>
    %31 = arith.mulf %30, %30 : vector<16x32xf32>
    %cst_25 = arith.constant dense<0.000000e+00> : vector<16xf32>
    %32 = vector.multi_reduction <add>, %31, %cst_25 [1] : vector<16x32xf32> to vector<16xf32>
    %33 = vector.shape_cast %32 : vector<16xf32> to vector<16x1xf32>
    %cst_26 = arith.constant 3.200000e+01 : f32
    %34 = vector.broadcast %cst_26 : f32 to vector<16x1xf32>
    %35 = arith.divf %33, %34 : vector<16x1xf32>
    %36 = vector.broadcast %28 : vector<16x1xf32> to vector<16x32xf32>
    %37 = arith.subf %22, %36 : vector<16x32xf32>
    %cst_27 = arith.constant 9.99999974E-6 : f32
    %38 = vector.broadcast %cst_27 : f32 to vector<16x1xf32>
    %39 = arith.addf %35, %38 : vector<16x1xf32>
    %40 = math.rsqrt %39 : vector<16x1xf32>
    %41 = vector.broadcast %40 : vector<16x1xf32> to vector<16x32xf32>
    %42 = arith.mulf %37, %41 : vector<16x32xf32>
    %43 = vector.broadcast %23 : vector<1x32xf32> to vector<16x32xf32>
    %44 = arith.mulf %42, %43 : vector<16x32xf32>
    %45 = vector.broadcast %24 : vector<1x32xf32> to vector<16x32xf32>
    %46 = arith.addf %44, %45 : vector<16x32xf32>
    %c0_28 = arith.constant 0 : index
    %c0_29 = arith.constant 0 : index
    %47 = vector.load %arg28[%c0_28, %c0_29] : memref<16x32xf32, #tpu.memory_space<vmem>>, vector<16x32xf32>
    tpu.vector_store %arg28[%c0_28, %c0_29], %46 {strides = array<i32>} : memref<16x32xf32, #tpu.memory_space<vmem>>, vector<16x32xf32>,
    return
  }
}

</mosaic_0001>

<llo_original>
// kernel: transformer_decoder.1
$region0: #{transformer_decoder.1}
  #allocation0 [shape = 'u32[]', space=smem, size = 0x4, offset = 0x4, fixed_abs, tag = 'smem constant byte address 0x4 - core index']
  #allocation1 [shape = 'u32[144,128]{1,0:T(1,128)}', space=vmem, size = 0x12000, scoped, tag = 'internal scratch']
  %s0 = inlined_call_operand.vmem [shape: f32[16,32], index: 0, kind: input, shape index: {}]
  %s1 = inlined_call_operand.vmem [shape: f32[32,32], index: 1, kind: input, shape index: {}]
  %s2 = inlined_call_operand.vmem [shape: f32[16,32], index: 2, kind: input, shape index: {}]
  %s3 = inlined_call_operand.vmem [shape: f32[32,32], index: 3, kind: input, shape index: {}]
  %s4 = inlined_call_operand.vmem [shape: f32[16,16], index: 4, kind: input, shape index: {}]
  %s5 = inlined_call_operand.vmem [shape: f32[16,32], index: 5, kind: input, shape index: {}]
  %s6 = inlined_call_operand.vmem [shape: bf16[32,32], index: 6, kind: input, shape index: {}]
  %s7 = inlined_call_operand.vmem [shape: f32[1,32], index: 7, kind: input, shape index: {}]
  %s8 = inlined_call_operand.vmem [shape: bf16[32,32], index: 8, kind: input, shape index: {}]
  %s9 = inlined_call_operand.vmem [shape: f32[1,32], index: 9, kind: input, shape index: {}]
  %s10 = inlined_call_operand.vmem [shape: bf16[32,32], index: 10, kind: input, shape index: {}]
  %s11 = inlined_call_operand.vmem [shape: f32[1,32], index: 11, kind: input, shape index: {}]
  %s12 = inlined_call_operand.vmem [shape: bf16[32,32], index: 12, kind: input, shape index: {}]
  %s13 = inlined_call_operand.vmem [shape: f32[1,32], index: 13, kind: input, shape index: {}]
  %s14 = inlined_call_operand.vmem [shape: bf16[32,32], index: 14, kind: input, shape index: {}]
  %s15 = inlined_call_operand.vmem [shape: f32[1,32], index: 15, kind: input, shape index: {}]
  %s16 = inlined_call_operand.vmem [shape: bf16[32,32], index: 16, kind: input, shape index: {}]
  %s17 = inlined_call_operand.vmem [shape: f32[1,32], index: 17, kind: input, shape index: {}]
  %s18 = inlined_call_operand.vmem [shape: bf16[32,32], index: 18, kind: input, shape index: {}]
  %s19 = inlined_call_operand.vmem [shape: f32[1,32], index: 19, kind: input, shape index: {}]
  %s20 = inlined_call_operand.vmem [shape: bf16[32,32], index: 20, kind: input, shape index: {}]
  %s21 = inlined_call_operand.vmem [shape: f32[1,32], index: 21, kind: input, shape index: {}]
  %s22 = inlined_call_operand.vmem [shape: bf16[32,64], index: 22, kind: input, shape index: {}]
  %s23 = inlined_call_operand.vmem [shape: f32[1,64], index: 23, kind: input, shape index: {}]
  %s24 = inlined_call_operand.vmem [shape: bf16[64,32], index: 24, kind: input, shape index: {}]
  %s25 = inlined_call_operand.vmem [shape: f32[1,32], index: 25, kind: input, shape index: {}]
  %s26 = inlined_call_operand.vmem [shape: f32[4,32], index: 26, kind: input, shape index: {}]
  %s27 = inlined_call_operand.vmem [shape: f32[4,32], index: 27, kind: input, shape index: {}]
  %s28 = inlined_call_operand.vmem [shape: f32[16,32], index: 28, kind: output, shape index: {}]
  %s29 = sld [smem:[#allocation0]]
  $region129: #{transformer_decoder.1} parent=0
    _
  %s31 = ssub.s32 1, %s29
  %s32 = scalar_select 0, %s31, %s29
  // Predicated region
  $region2: #{transformer_decoder.1} parent=0 // pred_check
    _
  $region3: #{transformer_decoder.1} parent=0 // pred_check_branch
    %34 = sbr.rel (0) target = $region5
  $region4: #{transformer_decoder.1} parent=0 // pred_region
    _
  $region5: #{transformer_decoder.1} parent=0 // pred_fallthru
    _
  // Predicated region
  $region6: #{transformer_decoder.1} parent=0 // pred_check
    _
  $region7: #{transformer_decoder.1} parent=0 // pred_check_branch
    %36 = sbr.rel (0) target = $region9
  $region8: #{transformer_decoder.1} parent=0 // pred_region
    _
  $region9: #{transformer_decoder.1} parent=0 // pred_fallthru
    _
  // Predicated region
  $region10: #{transformer_decoder.1} parent=0 // pred_check
    _
  $region11: #{transformer_decoder.1} parent=0 // pred_check_branch
    %38 = sbr.rel (0) target = $region13
  $region12: #{transformer_decoder.1} parent=0 // pred_region
    _
  $region13: #{transformer_decoder.1} parent=0 // pred_fallthru
    _
  // Predicated region
  $region14: #{transformer_decoder.1} parent=0 // pred_check
    _
  $region15: #{transformer_decoder.1} parent=0 // pred_check_branch
    %40 = sbr.rel (0) target = $region17
  $region16: #{transformer_decoder.1} parent=0 // pred_region
    _
  $region17: #{transformer_decoder.1} parent=0 // pred_fallthru
    _
  // Predicated region
  $region18: #{transformer_decoder.1} parent=0 // pred_check
    _
  $region19: #{transformer_decoder.1} parent=0 // pred_check_branch
    %42 = sbr.rel (0) target = $region21
  $region20: #{transformer_decoder.1} parent=0 // pred_region
    _
  $region21: #{transformer_decoder.1} parent=0 // pred_fallthru
    _
  // Predicated region
  $region22: #{transformer_decoder.1} parent=0 // pred_check
    _
  $region23: #{transformer_decoder.1} parent=0 // pred_check_branch
    %44 = sbr.rel (0) target = $region25
  $region24: #{transformer_decoder.1} parent=0 // pred_region
    _
  $region25: #{transformer_decoder.1} parent=0 // pred_fallthru
    _
  // Predicated region
  $region26: #{transformer_decoder.1} parent=0 // pred_check
    _
  $region27: #{transformer_decoder.1} parent=0 // pred_check_branch
    %46 = sbr.rel (0) target = $region29
  $region28: #{transformer_decoder.1} parent=0 // pred_region
    _
  $region29: #{transformer_decoder.1} parent=0 // pred_fallthru
    _
  // Predicated region
  $region30: #{transformer_decoder.1} parent=0 // pred_check
    _
  $region31: #{transformer_decoder.1} parent=0 // pred_check_branch
    %48 = sbr.rel (0) target = $region33
  $region32: #{transformer_decoder.1} parent=0 // pred_region
    _
  $region33: #{transformer_decoder.1} parent=0 // pred_fallthru
    _
  // Predicated region
  $region34: #{transformer_decoder.1} parent=0 // pred_check
    _
  $region35: #{transformer_decoder.1} parent=0 // pred_check_branch
    %50 = sbr.rel (0) target = $region37
  $region36: #{transformer_decoder.1} parent=0 // pred_region
    _
  $region37: #{transformer_decoder.1} parent=0 // pred_fallthru
    _
  // Predicated region
  $region38: #{transformer_decoder.1} parent=0 // pred_check
    _
  $region39: #{transformer_decoder.1} parent=0 // pred_check_branch
    %52 = sbr.rel (0) target = $region41
  $region40: #{transformer_decoder.1} parent=0 // pred_region
    _
  $region41: #{transformer_decoder.1} parent=0 // pred_fallthru
    _
  // Predicated region
  $region42: #{transformer_decoder.1} parent=0 // pred_check
    _
  $region43: #{transformer_decoder.1} parent=0 // pred_check_branch
    %54 = sbr.rel (0) target = $region45
  $region44: #{transformer_decoder.1} parent=0 // pred_region
    _
  $region45: #{transformer_decoder.1} parent=0 // pred_fallthru
    _
  // Predicated region
  $region46: #{transformer_decoder.1} parent=0 // pred_check
    _
  $region47: #{transformer_decoder.1} parent=0 // pred_check_branch
    %56 = sbr.rel (0) target = $region49
  $region48: #{transformer_decoder.1} parent=0 // pred_region
    _
  $region49: #{transformer_decoder.1} parent=0 // pred_fallthru
    _
  // Predicated region
  $region50: #{transformer_decoder.1} parent=0 // pred_check
    _
  $region51: #{transformer_decoder.1} parent=0 // pred_check_branch
    %58 = sbr.rel (0) target = $region53
  $region52: #{transformer_decoder.1} parent=0 // pred_region
    _
  $region53: #{transformer_decoder.1} parent=0 // pred_fallthru
    _
  // Predicated region
  $region54: #{transformer_decoder.1} parent=0 // pred_check
    _
  $region55: #{transformer_decoder.1} parent=0 // pred_check_branch
    %60 = sbr.rel (0) target = $region57
  $region56: #{transformer_decoder.1} parent=0 // pred_region
    _
  $region57: #{transformer_decoder.1} parent=0 // pred_fallthru
    _
  // Predicated region
  $region58: #{transformer_decoder.1} parent=0 // pred_check
    _
  $region59: #{transformer_decoder.1} parent=0 // pred_check_branch
    %62 = sbr.rel (0) target = $region61
  $region60: #{transformer_decoder.1} parent=0 // pred_region
    _
  $region61: #{transformer_decoder.1} parent=0 // pred_fallthru
    _
  // Predicated region
  $region62: #{transformer_decoder.1} parent=0 // pred_check
    _
  $region63: #{transformer_decoder.1} parent=0 // pred_check_branch
    %64 = sbr.rel (0) target = $region65
  $region64: #{transformer_decoder.1} parent=0 // pred_region
    _
  $region65: #{transformer_decoder.1} parent=0 // pred_fallthru
    _
  // Predicated region
  $region66: #{transformer_decoder.1} parent=0 // pred_check
    _
  $region67: #{transformer_decoder.1} parent=0 // pred_check_branch
    %66 = sbr.rel (0) target = $region69
  $region68: #{transformer_decoder.1} parent=0 // pred_region
    _
  $region69: #{transformer_decoder.1} parent=0 // pred_fallthru
    _
  // Predicated region
  $region70: #{transformer_decoder.1} parent=0 // pred_check
    _
  $region71: #{transformer_decoder.1} parent=0 // pred_check_branch
    %68 = sbr.rel (0) target = $region73
  $region72: #{transformer_decoder.1} parent=0 // pred_region
    _
  $region73: #{transformer_decoder.1} parent=0 // pred_fallthru
    _
  // Predicated region
  $region74: #{transformer_decoder.1} parent=0 // pred_check
    _
  $region75: #{transformer_decoder.1} parent=0 // pred_check_branch
    %70 = sbr.rel (0) target = $region77
  $region76: #{transformer_decoder.1} parent=0 // pred_region
    _
  $region77: #{transformer_decoder.1} parent=0 // pred_fallthru
    _
  // Predicated region
  $region78: #{transformer_decoder.1} parent=0 // pred_check
    _
  $region79: #{transformer_decoder.1} parent=0 // pred_check_branch
    %72 = sbr.rel (0) target = $region81
  $region80: #{transformer_decoder.1} parent=0 // pred_region
    _
  $region81: #{transformer_decoder.1} parent=0 // pred_fallthru
    _
  // Predicated region
  $region82: #{transformer_decoder.1} parent=0 // pred_check
    _
  $region83: #{transformer_decoder.1} parent=0 // pred_check_branch
    %74 = sbr.rel (0) target = $region85
  $region84: #{transformer_decoder.1} parent=0 // pred_region
    _
  $region85: #{transformer_decoder.1} parent=0 // pred_fallthru
    _
  // Predicated region
  $region86: #{transformer_decoder.1} parent=0 // pred_check
    _
  $region87: #{transformer_decoder.1} parent=0 // pred_check_branch
    %76 = sbr.rel (0) target = $region89
  $region88: #{transformer_decoder.1} parent=0 // pred_region
    _
  $region89: #{transformer_decoder.1} parent=0 // pred_fallthru
    _
  // Predicated region
  $region90: #{transformer_decoder.1} parent=0 // pred_check
    _
  $region91: #{transformer_decoder.1} parent=0 // pred_check_branch
    %78 = sbr.rel (0) target = $region93
  $region92: #{transformer_decoder.1} parent=0 // pred_region
    _
  $region93: #{transformer_decoder.1} parent=0 // pred_fallthru
    _
  // Predicated region
  $region94: #{transformer_decoder.1} parent=0 // pred_check
    _
  $region95: #{transformer_decoder.1} parent=0 // pred_check_branch
    %80 = sbr.rel (0) target = $region97
  $region96: #{transformer_decoder.1} parent=0 // pred_region
    _
  $region97: #{transformer_decoder.1} parent=0 // pred_fallthru
    _
  // Predicated region
  $region98: #{transformer_decoder.1} parent=0 // pred_check
    _
  $region99: #{transformer_decoder.1} parent=0 // pred_check_branch
    %82 = sbr.rel (0) target = $region101
  $region100: #{transformer_decoder.1} parent=0 // pred_region
    _
  $region101: #{transformer_decoder.1} parent=0 // pred_fallthru
    _
  // Predicated region
  $region102: #{transformer_decoder.1} parent=0 // pred_check
    _
  $region103: #{transformer_decoder.1} parent=0 // pred_check_branch
    %84 = sbr.rel (0) target = $region105
  $region104: #{transformer_decoder.1} parent=0 // pred_region
    _
  $region105: #{transformer_decoder.1} parent=0 // pred_fallthru
    _
  // Predicated region
  $region106: #{transformer_decoder.1} parent=0 // pred_check
    _
  $region107: #{transformer_decoder.1} parent=0 // pred_check_branch
    %86 = sbr.rel (0) target = $region109
  $region108: #{transformer_decoder.1} parent=0 // pred_region
    _
  $region109: #{transformer_decoder.1} parent=0 // pred_fallthru
    _
  // Predicated region
  $region110: #{transformer_decoder.1} parent=0 // pred_check
    _
  $region111: #{transformer_decoder.1} parent=0 // pred_check_branch
    %88 = sbr.rel (0) target = $region113
  $region112: #{transformer_decoder.1} parent=0 // pred_region
    _
  $region113: #{transformer_decoder.1} parent=0 // pred_fallthru
    _
  %v90 = vld [vmem:[%s0] sm:$0xff]
  %v91 = vld [vmem:[%s0 + $0x8] sm:$0xff]
  %v92 = vld [vmem:[%s2] sm:$0xff]
  %v93 = vld [vmem:[%s2 + $0x8] sm:$0xff]
  %v94 = vld [vmem:[%s4] sm:$0xff]
  %v95 = vld [vmem:[%s4 + $0x8] sm:$0xff]
  %v96 = vld [vmem:[%s5] sm:$0xff]
  %v97 = vld [vmem:[%s5 + $0x8] sm:$0xff]
  %v98 = vld [vmem:[%s1] sm:$0xff]
  %v99 = vld [vmem:[%s1 + $0x8] sm:$0xff]
  %v100 = vld [vmem:[%s1 + $0x10] sm:$0xff]
  %v101 = vld [vmem:[%s1 + $0x18] sm:$0xff]
  %v102 = vld [vmem:[%s3] sm:$0xff]
  %v103 = vld [vmem:[%s3 + $0x8] sm:$0xff]
  %v104 = vld [vmem:[%s3 + $0x10] sm:$0xff]
  %v105 = vld [vmem:[%s3 + $0x18] sm:$0xff]
  %v106 = vadd.f32 %v98, %v102
  %v107 = vadd.f32 %v99, %v103
  %v108 = vadd.f32 %v100, %v104
  %v109 = vadd.f32 %v101, %v105
  %v110 = vpack.c.bf16 %v107, %v106
  %v111 = vpack.c.bf16 %v109, %v108
  %v112 = vld [vmem:[%s16] sm:$0xf]
  %v113 = vld [vmem:[%s16 + $0x4] sm:$0xf]
  %v114 = vld [vmem:[%s16 + $0x8] sm:$0xf]
  %v115 = vld [vmem:[%s16 + $0xc] sm:$0xf]
  %v116 = vld [vmem:[%s17] sm:$0x1]
  %v118 = vlaneseq
  %v119 = vshrl.u32 %v118, 7
  %v120 = vsub.s32 0, %v119
  %v121 = vrot.slane %v116, %v120
  %v127 = vunpack.c.l.b16 %v112
  %v128 = vunpack.c.l.b16 %v113
  %v129 = vunpack.c.l.b16 %v114
  %v130 = vunpack.c.l.b16 %v115
  %v131 = vpack.c.b16 %v128, %v127
  %v132 = vpack.c.b16 %v130, %v129
  %vm135 = vcmask 261120
  %v137 = vsel %vm135, %v110, 0
  %v140 = vsel %vm135, %v111, 0
  %142 = vmatprep.subr.bf16.mxu0 0
  %143 = vmatpush1.bf16.msra.mxu0 %v131
  %144 = vmatprep.subr.bf16.mxu0 0
  %145 = vmatpush1.bf16.msra.mxu0 %v132
  %146 = vmatprep.subr.bf16.mxu0 0
  %147 = vmatpush1.bf16.msra.mxu0 0
  %148 = vmatprep.subr.bf16.mxu0 0
  %149 = vmatpush1.bf16.msra.mxu0 0
  %150 = vmatprep.subr.bf16.mxu0 0
  %151 = vmatpush1.bf16.msra.mxu0 0
  %152 = vmatprep.subr.bf16.mxu0 0
  %153 = vmatpush1.bf16.msra.mxu0 0
  %154 = vmatprep.subr.bf16.mxu0 0
  %155 = vmatpush1.bf16.msra.mxu0 0
  %156 = vmatprep.subr.bf16.mxu0 0
  %157 = vmatpush1.bf16.msra.mxu0 0
  %158 = vmatprep.subr.bf16.mxu0 0
  %159 = vmatpush1.bf16.msra.mxu0 0
  %160 = vmatprep.subr.bf16.mxu0 0
  %161 = vmatpush1.bf16.msra.mxu0 0
  %162 = vmatprep.subr.bf16.mxu0 0
  %163 = vmatpush1.bf16.msra.mxu0 0
  %164 = vmatprep.subr.bf16.mxu0 0
  %165 = vmatpush1.bf16.msra.mxu0 0
  %166 = vmatprep.subr.bf16.mxu0 0
  %167 = vmatpush1.bf16.msra.mxu0 0
  %168 = vmatprep.subr.bf16.mxu0 0
  %169 = vmatpush1.bf16.msra.mxu0 0
  %170 = vmatprep.subr.bf16.mxu0 0
  %171 = vmatpush1.bf16.msra.mxu0 0
  %172 = vmatprep.subr.bf16.mxu0 0
  %173 = vmatpush1.bf16.msra.mxu0 0
  %174 = vmatprep.mubr.bf16.mxu0 0
  %175 = vmatmul.mubr.bf16.gmra.mrb[0].mxu0 %v137
  %v176 = vpop.f32.mrb[0].mxu0
  %v177 = vadd.f32 %v121, %v176
  %v178 = vpop.f32.mrb[0].mxu0
  %v179 = vpop.f32.mrb[0].mxu0
  %v180 = vadd.f32 %v121, %v179
  %v181 = vpop.f32.mrb[0].mxu0
  %182 = vmatprep.mubr.bf16.mxu0 0
  %183 = vmatmul.mubr.bf16.gmra.mrb[0].mxu0 %v140
  %v184 = vpop.f32.mrb[0].mxu0
  %v185 = vadd.f32 %v121, %v184
  %v186 = vpop.f32.mrb[0].mxu0
  %v187 = vpop.f32.mrb[0].mxu0
  %v188 = vadd.f32 %v121, %v187
  %v189 = vpop.f32.mrb[0].mxu0
  %190 = vdwg.mxu0
  %v191 = vpack.c.bf16 %v180, %v177
  %v192 = vpack.c.bf16 %v188, %v185
  %v193 = vpack.c.bf16 %v99, %v98
  %v194 = vpack.c.bf16 %v101, %v100
  %v195 = vld [vmem:[%s18] sm:$0xf]
  %v196 = vld [vmem:[%s18 + $0x4] sm:$0xf]
  %v197 = vld [vmem:[%s18 + $0x8] sm:$0xf]
  %v198 = vld [vmem:[%s18 + $0xc] sm:$0xf]
  %v199 = vld [vmem:[%s19] sm:$0x1]
  %v201 = vlaneseq
  %v202 = vshrl.u32 %v201, 7
  %v203 = vsub.s32 0, %v202
  %v204 = vrot.slane %v199, %v203
  %v210 = vunpack.c.l.b16 %v195
  %v211 = vunpack.c.l.b16 %v196
  %v212 = vunpack.c.l.b16 %v197
  %v213 = vunpack.c.l.b16 %v198
  %v214 = vpack.c.b16 %v211, %v210
  %v215 = vpack.c.b16 %v213, %v212
  %v219 = vsel %vm135, %v193, 0
  %v222 = vsel %vm135, %v194, 0
  %224 = vmatprep.subr.bf16.mxu0 0
  %225 = vmatpush1.bf16.msra.mxu0 %v214
  %226 = vmatprep.subr.bf16.mxu0 0
  %227 = vmatpush1.bf16.msra.mxu0 %v215
  %228 = vmatprep.subr.bf16.mxu0 0
  %229 = vmatpush1.bf16.msra.mxu0 0
  %230 = vmatprep.subr.bf16.mxu0 0
  %231 = vmatpush1.bf16.msra.mxu0 0
  %232 = vmatprep.subr.bf16.mxu0 0
  %233 = vmatpush1.bf16.msra.mxu0 0
  %234 = vmatprep.subr.bf16.mxu0 0
  %235 = vmatpush1.bf16.msra.mxu0 0
  %236 = vmatprep.subr.bf16.mxu0 0
  %237 = vmatpush1.bf16.msra.mxu0 0
  %238 = vmatprep.subr.bf16.mxu0 0
  %239 = vmatpush1.bf16.msra.mxu0 0
  %240 = vmatprep.subr.bf16.mxu0 0
  %241 = vmatpush1.bf16.msra.mxu0 0
  %242 = vmatprep.subr.bf16.mxu0 0
  %243 = vmatpush1.bf16.msra.mxu0 0
  %244 = vmatprep.subr.bf16.mxu0 0
  %245 = vmatpush1.bf16.msra.mxu0 0
  %246 = vmatprep.subr.bf16.mxu0 0
  %247 = vmatpush1.bf16.msra.mxu0 0
  %248 = vmatprep.subr.bf16.mxu0 0
  %249 = vmatpush1.bf16.msra.mxu0 0
  %250 = vmatprep.subr.bf16.mxu0 0
  %251 = vmatpush1.bf16.msra.mxu0 0
  %252 = vmatprep.subr.bf16.mxu0 0
  %253 = vmatpush1.bf16.msra.mxu0 0
  %254 = vmatprep.subr.bf16.mxu0 0
  %255 = vmatpush1.bf16.msra.mxu0 0
  %256 = vmatprep.mubr.bf16.mxu0 0
  %257 = vmatmul.mubr.bf16.gmra.mrb[0].mxu0 %v219
  %v258 = vpop.f32.mrb[0].mxu0
  %v259 = vadd.f32 %v204, %v258
  %v260 = vpop.f32.mrb[0].mxu0
  %v261 = vpop.f32.mrb[0].mxu0
  %v262 = vadd.f32 %v204, %v261
  %v263 = vpop.f32.mrb[0].mxu0
  %264 = vmatprep.mubr.bf16.mxu0 0
  %265 = vmatmul.mubr.bf16.gmra.mrb[0].mxu0 %v222
  %v266 = vpop.f32.mrb[0].mxu0
  %v267 = vadd.f32 %v204, %v266
  %v268 = vpop.f32.mrb[0].mxu0
  %v269 = vpop.f32.mrb[0].mxu0
  %v270 = vadd.f32 %v204, %v269
  %v271 = vpop.f32.mrb[0].mxu0
  %272 = vdwg.mxu0
  %v273 = vpack.c.bf16 %v262, %v259
  %v274 = vpack.c.bf16 %v270, %v267
  loop: start=0, step=1, limit=2
  $region114: #{transformer_decoder.1} parent=0 // loop_pre_header
    _
  $region115: #{transformer_decoder.1} parent=0 // loop_header
    %s276 = sphi 0, %s280
    %p277 = scmp.ge.s32.totalorder %s276, 2
    %v281 = vphi %v90, %v2027
    %v282 = vphi %v91, %v2028
  $region116: #{transformer_decoder.1} parent=0 // loop_header_branch
    %279 = sbr.rel (%p277) target = $region120
  $region117: #{transformer_decoder.1} parent=0 // loop_body
    %v283 = vadd.f32 %v281, %v92
    %v284 = vadd.f32 %v282, %v93
    %v285 = vpack.c.bf16 %v284, %v283
    %v286 = vld [vmem:[%s6] sm:$0xf]
    %v287 = vld [vmem:[%s6 + $0x4] sm:$0xf]
    %v288 = vld [vmem:[%s6 + $0x8] sm:$0xf]
    %v289 = vld [vmem:[%s6 + $0xc] sm:$0xf]
    %v290 = vld [vmem:[%s7] sm:$0x1]
    %v292 = vlaneseq
    %v293 = vshrl.u32 %v292, 7
    %v294 = vsub.s32 0, %v293
    %v295 = vrot.slane %v290, %v294
    %v301 = vunpack.c.l.b16 %v286
    %v302 = vunpack.c.l.b16 %v287
    %v303 = vunpack.c.l.b16 %v288
    %v304 = vunpack.c.l.b16 %v289
    %v305 = vpack.c.b16 %v302, %v301
    %v306 = vpack.c.b16 %v304, %v303
    %v310 = vsel %vm135, %v285, 0
    %312 = vmatprep.subr.bf16.mxu0 0
    %313 = vmatpush1.bf16.msra.mxu0 %v305
    %314 = vmatprep.subr.bf16.mxu0 0
    %315 = vmatpush1.bf16.msra.mxu0 %v306
    %316 = vmatprep.subr.bf16.mxu0 0
    %317 = vmatpush1.bf16.msra.mxu0 0
    %318 = vmatprep.subr.bf16.mxu0 0
    %319 = vmatpush1.bf16.msra.mxu0 0
    %320 = vmatprep.subr.bf16.mxu0 0
    %321 = vmatpush1.bf16.msra.mxu0 0
    %322 = vmatprep.subr.bf16.mxu0 0
    %323 = vmatpush1.bf16.msra.mxu0 0
    %324 = vmatprep.subr.bf16.mxu0 0
    %325 = vmatpush1.bf16.msra.mxu0 0
    %326 = vmatprep.subr.bf16.mxu0 0
    %327 = vmatpush1.bf16.msra.mxu0 0
    %328 = vmatprep.subr.bf16.mxu0 0
    %329 = vmatpush1.bf16.msra.mxu0 0
    %330 = vmatprep.subr.bf16.mxu0 0
    %331 = vmatpush1.bf16.msra.mxu0 0
    %332 = vmatprep.subr.bf16.mxu0 0
    %333 = vmatpush1.bf16.msra.mxu0 0
    %334 = vmatprep.subr.bf16.mxu0 0
    %335 = vmatpush1.bf16.msra.mxu0 0
    %336 = vmatprep.subr.bf16.mxu0 0
    %337 = vmatpush1.bf16.msra.mxu0 0
    %338 = vmatprep.subr.bf16.mxu0 0
    %339 = vmatpush1.bf16.msra.mxu0 0
    %340 = vmatprep.subr.bf16.mxu0 0
    %341 = vmatpush1.bf16.msra.mxu0 0
    %342 = vmatprep.subr.bf16.mxu0 0
    %343 = vmatpush1.bf16.msra.mxu0 0
    %344 = vmatprep.mubr.bf16.mxu0 0
    %345 = vmatmul.mubr.bf16.gmra.mrb[0].mxu0 %v310
    %v346 = vpop.f32.mrb[0].mxu0
    %v347 = vadd.f32 %v295, %v346
    %v348 = vpop.f32.mrb[0].mxu0
    %v349 = vpop.f32.mrb[0].mxu0
    %v350 = vadd.f32 %v295, %v349
    %v351 = vpop.f32.mrb[0].mxu0
    %352 = vdwg.mxu0
    %v353 = vld [vmem:[%s8] sm:$0xf]
    %v354 = vld [vmem:[%s8 + $0x4] sm:$0xf]
    %v355 = vld [vmem:[%s8 + $0x8] sm:$0xf]
    %v356 = vld [vmem:[%s8 + $0xc] sm:$0xf]
    %v357 = vld [vmem:[%s9] sm:$0x1]
    %v359 = vlaneseq
    %v360 = vshrl.u32 %v359, 7
    %v361 = vsub.s32 0, %v360
    %v362 = vrot.slane %v357, %v361
    %v368 = vunpack.c.l.b16 %v353
    %v369 = vunpack.c.l.b16 %v354
    %v370 = vunpack.c.l.b16 %v355
    %v371 = vunpack.c.l.b16 %v356
    %v372 = vpack.c.b16 %v369, %v368
    %v373 = vpack.c.b16 %v371, %v370
    %376 = vmatprep.subr.bf16.mxu0 0
    %377 = vmatpush1.bf16.msra.mxu0 %v372
    %378 = vmatprep.subr.bf16.mxu0 0
    %379 = vmatpush1.bf16.msra.mxu0 %v373
    %380 = vmatprep.subr.bf16.mxu0 0
    %381 = vmatpush1.bf16.msra.mxu0 0
    %382 = vmatprep.subr.bf16.mxu0 0
    %383 = vmatpush1.bf16.msra.mxu0 0
    %384 = vmatprep.subr.bf16.mxu0 0
    %385 = vmatpush1.bf16.msra.mxu0 0
    %386 = vmatprep.subr.bf16.mxu0 0
    %387 = vmatpush1.bf16.msra.mxu0 0
    %388 = vmatprep.subr.bf16.mxu0 0
    %389 = vmatpush1.bf16.msra.mxu0 0
    %390 = vmatprep.subr.bf16.mxu0 0
    %391 = vmatpush1.bf16.msra.mxu0 0
    %392 = vmatprep.subr.bf16.mxu0 0
    %393 = vmatpush1.bf16.msra.mxu0 0
    %394 = vmatprep.subr.bf16.mxu0 0
    %395 = vmatpush1.bf16.msra.mxu0 0
    %396 = vmatprep.subr.bf16.mxu0 0
    %397 = vmatpush1.bf16.msra.mxu0 0
    %398 = vmatprep.subr.bf16.mxu0 0
    %399 = vmatpush1.bf16.msra.mxu0 0
    %400 = vmatprep.subr.bf16.mxu0 0
    %401 = vmatpush1.bf16.msra.mxu0 0
    %402 = vmatprep.subr.bf16.mxu0 0
    %403 = vmatpush1.bf16.msra.mxu0 0
    %404 = vmatprep.subr.bf16.mxu0 0
    %405 = vmatpush1.bf16.msra.mxu0 0
    %406 = vmatprep.subr.bf16.mxu0 0
    %407 = vmatpush1.bf16.msra.mxu0 0
    %408 = vmatprep.mubr.bf16.mxu0 0
    %409 = vmatmul.mubr.bf16.gmra.mrb[0].mxu0 %v310
    %v410 = vpop.f32.mrb[0].mxu0
    %v411 = vadd.f32 %v362, %v410
    %v412 = vpop.f32.mrb[0].mxu0
    %v413 = vpop.f32.mrb[0].mxu0
    %v414 = vadd.f32 %v362, %v413
    %v415 = vpop.f32.mrb[0].mxu0
    %416 = vdwg.mxu0
    %v417 = vpack.c.bf16 %v414, %v411
    %v418 = vpack.c.bf16 %v282, %v281
    %v419 = vld [vmem:[%s10] sm:$0xf]
    %v420 = vld [vmem:[%s10 + $0x4] sm:$0xf]
    %v421 = vld [vmem:[%s10 + $0x8] sm:$0xf]
    %v422 = vld [vmem:[%s10 + $0xc] sm:$0xf]
    %v423 = vld [vmem:[%s11] sm:$0x1]
    %v425 = vlaneseq
    %v426 = vshrl.u32 %v425, 7
    %v427 = vsub.s32 0, %v426
    %v428 = vrot.slane %v423, %v427
    %v434 = vunpack.c.l.b16 %v419
    %v435 = vunpack.c.l.b16 %v420
    %v436 = vunpack.c.l.b16 %v421
    %v437 = vunpack.c.l.b16 %v422
    %v438 = vpack.c.b16 %v435, %v434
    %v439 = vpack.c.b16 %v437, %v436
    %v443 = vsel %vm135, %v418, 0
    %445 = vmatprep.subr.bf16.mxu0 0
    %446 = vmatpush1.bf16.msra.mxu0 %v438
    %447 = vmatprep.subr.bf16.mxu0 0
    %448 = vmatpush1.bf16.msra.mxu0 %v439
    %449 = vmatprep.subr.bf16.mxu0 0
    %450 = vmatpush1.bf16.msra.mxu0 0
    %451 = vmatprep.subr.bf16.mxu0 0
    %452 = vmatpush1.bf16.msra.mxu0 0
    %453 = vmatprep.subr.bf16.mxu0 0
    %454 = vmatpush1.bf16.msra.mxu0 0
    %455 = vmatprep.subr.bf16.mxu0 0
    %456 = vmatpush1.bf16.msra.mxu0 0
    %457 = vmatprep.subr.bf16.mxu0 0
    %458 = vmatpush1.bf16.msra.mxu0 0
    %459 = vmatprep.subr.bf16.mxu0 0
    %460 = vmatpush1.bf16.msra.mxu0 0
    %461 = vmatprep.subr.bf16.mxu0 0
    %462 = vmatpush1.bf16.msra.mxu0 0
    %463 = vmatprep.subr.bf16.mxu0 0
    %464 = vmatpush1.bf16.msra.mxu0 0
    %465 = vmatprep.subr.bf16.mxu0 0
    %466 = vmatpush1.bf16.msra.mxu0 0
    %467 = vmatprep.subr.bf16.mxu0 0
    %468 = vmatpush1.bf16.msra.mxu0 0
    %469 = vmatprep.subr.bf16.mxu0 0
    %470 = vmatpush1.bf16.msra.mxu0 0
    %471 = vmatprep.subr.bf16.mxu0 0
    %472 = vmatpush1.bf16.msra.mxu0 0
    %473 = vmatprep.subr.bf16.mxu0 0
    %474 = vmatpush1.bf16.msra.mxu0 0
    %475 = vmatprep.subr.bf16.mxu0 0
    %476 = vmatpush1.bf16.msra.mxu0 0
    %477 = vmatprep.mubr.bf16.mxu0 0
    %478 = vmatmul.mubr.bf16.gmra.mrb[0].mxu0 %v443
    %v479 = vpop.f32.mrb[0].mxu0
    %v480 = vadd.f32 %v428, %v479
    %v481 = vpop.f32.mrb[0].mxu0
    %v482 = vpop.f32.mrb[0].mxu0
    %v483 = vadd.f32 %v428, %v482
    %v484 = vpop.f32.mrb[0].mxu0
    %485 = vdwg.mxu0
    %v486 = vpack.c.bf16 %v483, %v480
    %v487 = vpack.c.bf16 %v350, %v347
    %vm488 = vcmask 64512
    %v490 = vsel %vm488, %v487, 0
    %v493 = vsel %vm488, %v417, 0
    %495 = vmatprep.subr.bf16.mxu0 0
    %496 = vmatpush1.bf16.xpose.msra.mxu0 %v493
    %497 = vmatprep.subr.bf16.mxu0 0
    %498 = vmatpush1.bf16.xpose.msra.mxu0 0
    %499 = vmatprep.subr.bf16.mxu0 0
    %500 = vmatpush1.bf16.xpose.msra.mxu0 0
    %501 = vmatprep.subr.bf16.mxu0 0
    %502 = vmatpush1.bf16.xpose.msra.mxu0 0
    %503 = vmatprep.subr.bf16.mxu0 0
    %504 = vmatpush1.bf16.xpose.msra.mxu0 0
    %505 = vmatprep.subr.bf16.mxu0 0
    %506 = vmatpush1.bf16.xpose.msra.mxu0 0
    %507 = vmatprep.subr.bf16.mxu0 0
    %508 = vmatpush1.bf16.xpose.msra.mxu0 0
    %509 = vmatprep.subr.bf16.mxu0 0
    %510 = vmatpush1.bf16.xpose.msra.mxu0 0
    %511 = vmatprep.subr.bf16.mxu0 0
    %512 = vmatpush1.bf16.xpose.msra.mxu0 0
    %513 = vmatprep.subr.bf16.mxu0 0
    %514 = vmatpush1.bf16.xpose.msra.mxu0 0
    %515 = vmatprep.subr.bf16.mxu0 0
    %516 = vmatpush1.bf16.xpose.msra.mxu0 0
    %517 = vmatprep.subr.bf16.mxu0 0
    %518 = vmatpush1.bf16.xpose.msra.mxu0 0
    %519 = vmatprep.subr.bf16.mxu0 0
    %520 = vmatpush1.bf16.xpose.msra.mxu0 0
    %521 = vmatprep.subr.bf16.mxu0 0
    %522 = vmatpush1.bf16.xpose.msra.mxu0 0
    %523 = vmatprep.subr.bf16.mxu0 0
    %524 = vmatpush1.bf16.xpose.msra.mxu0 0
    %525 = vmatprep.subr.bf16.mxu0 0
    %526 = vmatpush1.bf16.xpose.msra.mxu0 0
    %527 = vmatprep.mubr.bf16.mxu0 0
    %528 = vmatmul.mubr.bf16.gmra.mrb[0].mxu0 %v490
    %v529 = vpop.f32.mrb[0].mxu0
    %v530 = vadd.f32 %v94, %v529
    %v531 = vpop.f32.mrb[0].mxu0
    %v532 = vpop.f32.mrb[0].mxu0
    %v533 = vadd.f32 %v95, %v532
    %v534 = vpop.f32.mrb[0].mxu0
    %535 = vdwg.mxu0
    %vm536 = vcmask 130048
    %v537 = vsel %vm536, %v530, -inf
    %538 = vmax.xlane.f32.xlu0 %v537
    %v539 = vpop.xlane.xlu0 %538
    %v540 = vsel %vm536, %v533, -inf
    %541 = vmax.xlane.f32.xlu0 %v540
    %v542 = vpop.xlane.xlu0 %541
    %v543 = vsub.f32 %v530, %v539
    %v544 = vsub.f32 %v533, %v542
    %v545 = vmul.f32 %v543, 1.442695
    %v546 = vpow.pop %v545
    %v547 = vmul.f32 %v544, 1.442695
    %v548 = vpow.pop %v547
    %v549 = vsel %vm536, %v546, 0.0
    %550 = vadd.xlane.f32.xlu0 %v549
    %v551 = vpop.xlane.xlu0 %550
    %v552 = vsel %vm536, %v548, 0.0
    %553 = vadd.xlane.f32.xlu0 %v552
    %v554 = vpop.xlane.xlu0 %553
    %v555 = vrcp.pop %v551
    %v556 = vrcp.pop %v554
    %v557 = vmul.f32 %v546, %v555
    %v558 = vmul.f32 %v548, %v556
    %v559 = vpack.c.bf16 %v558, %v557
    %v561 = vsel %vm536, %v559, 0
    %563 = vmatprep.subr.bf16.mxu0 0
    %564 = vmatpush1.bf16.msra.mxu0 %v486
    %565 = vmatprep.subr.bf16.mxu0 0
    %566 = vmatpush1.bf16.msra.mxu0 0
    %567 = vmatprep.subr.bf16.mxu0 0
    %568 = vmatpush1.bf16.msra.mxu0 0
    %569 = vmatprep.subr.bf16.mxu0 0
    %570 = vmatpush1.bf16.msra.mxu0 0
    %571 = vmatprep.subr.bf16.mxu0 0
    %572 = vmatpush1.bf16.msra.mxu0 0
    %573 = vmatprep.subr.bf16.mxu0 0
    %574 = vmatpush1.bf16.msra.mxu0 0
    %575 = vmatprep.subr.bf16.mxu0 0
    %576 = vmatpush1.bf16.msra.mxu0 0
    %577 = vmatprep.subr.bf16.mxu0 0
    %578 = vmatpush1.bf16.msra.mxu0 0
    %579 = vmatprep.subr.bf16.mxu0 0
    %580 = vmatpush1.bf16.msra.mxu0 0
    %581 = vmatprep.subr.bf16.mxu0 0
    %582 = vmatpush1.bf16.msra.mxu0 0
    %583 = vmatprep.subr.bf16.mxu0 0
    %584 = vmatpush1.bf16.msra.mxu0 0
    %585 = vmatprep.subr.bf16.mxu0 0
    %586 = vmatpush1.bf16.msra.mxu0 0
    %587 = vmatprep.subr.bf16.mxu0 0
    %588 = vmatpush1.bf16.msra.mxu0 0
    %589 = vmatprep.subr.bf16.mxu0 0
    %590 = vmatpush1.bf16.msra.mxu0 0
    %591 = vmatprep.subr.bf16.mxu0 0
    %592 = vmatpush1.bf16.msra.mxu0 0
    %593 = vmatprep.subr.bf16.mxu0 0
    %594 = vmatpush1.bf16.msra.mxu0 0
    %595 = vmatprep.mubr.bf16.mxu0 0
    %596 = vmatmul.mubr.bf16.gmra.mrb[0].mxu0 %v561
    %v597 = vpop.f32.mrb[0].mxu0
    %v598 = vadd.f32 0.0, %v597
    %v599 = vpop.f32.mrb[0].mxu0
    %v600 = vpop.f32.mrb[0].mxu0
    %v601 = vadd.f32 0.0, %v600
    %v602 = vpop.f32.mrb[0].mxu0
    %603 = vdwg.mxu0
    %605 = vrot.lane.b32.xlu0 %v487, 120
    %v606 = vpop.permute.xlu0 %605
    %608 = vrot.lane.b32.xlu0 %v417, 120
    %v609 = vpop.permute.xlu0 %608
    %v611 = vsel %vm488, %v606, 0
    %v614 = vsel %vm488, %v609, 0
    %616 = vmatprep.subr.bf16.mxu0 0
    %617 = vmatpush1.bf16.xpose.msra.mxu0 %v614
    %618 = vmatprep.subr.bf16.mxu0 0
    %619 = vmatpush1.bf16.xpose.msra.mxu0 0
    %620 = vmatprep.subr.bf16.mxu0 0
    %621 = vmatpush1.bf16.xpose.msra.mxu0 0
    %622 = vmatprep.subr.bf16.mxu0 0
    %623 = vmatpush1.bf16.xpose.msra.mxu0 0
    %624 = vmatprep.subr.bf16.mxu0 0
    %625 = vmatpush1.bf16.xpose.msra.mxu0 0
    %626 = vmatprep.subr.bf16.mxu0 0
    %627 = vmatpush1.bf16.xpose.msra.mxu0 0
    %628 = vmatprep.subr.bf16.mxu0 0
    %629 = vmatpush1.bf16.xpose.msra.mxu0 0
    %630 = vmatprep.subr.bf16.mxu0 0
    %631 = vmatpush1.bf16.xpose.msra.mxu0 0
    %632 = vmatprep.subr.bf16.mxu0 0
    %633 = vmatpush1.bf16.xpose.msra.mxu0 0
    %634 = vmatprep.subr.bf16.mxu0 0
    %635 = vmatpush1.bf16.xpose.msra.mxu0 0
    %636 = vmatprep.subr.bf16.mxu0 0
    %637 = vmatpush1.bf16.xpose.msra.mxu0 0
    %638 = vmatprep.subr.bf16.mxu0 0
    %639 = vmatpush1.bf16.xpose.msra.mxu0 0
    %640 = vmatprep.subr.bf16.mxu0 0
    %641 = vmatpush1.bf16.xpose.msra.mxu0 0
    %642 = vmatprep.subr.bf16.mxu0 0
    %643 = vmatpush1.bf16.xpose.msra.mxu0 0
    %644 = vmatprep.subr.bf16.mxu0 0
    %645 = vmatpush1.bf16.xpose.msra.mxu0 0
    %646 = vmatprep.subr.bf16.mxu0 0
    %647 = vmatpush1.bf16.xpose.msra.mxu0 0
    %648 = vmatprep.mubr.bf16.mxu0 0
    %649 = vmatmul.mubr.bf16.gmra.mrb[0].mxu0 %v611
    %v650 = vpop.f32.mrb[0].mxu0
    %v651 = vadd.f32 %v94, %v650
    %v652 = vpop.f32.mrb[0].mxu0
    %v653 = vpop.f32.mrb[0].mxu0
    %v654 = vadd.f32 %v95, %v653
    %v655 = vpop.f32.mrb[0].mxu0
    %656 = vdwg.mxu0
    %v657 = vsel %vm536, %v651, -inf
    %658 = vmax.xlane.f32.xlu0 %v657
    %v659 = vpop.xlane.xlu0 %658
    %v660 = vsel %vm536, %v654, -inf
    %661 = vmax.xlane.f32.xlu0 %v660
    %v662 = vpop.xlane.xlu0 %661
    %v663 = vsub.f32 %v651, %v659
    %v664 = vsub.f32 %v654, %v662
    %v665 = vmul.f32 %v663, 1.442695
    %v666 = vpow.pop %v665
    %v667 = vmul.f32 %v664, 1.442695
    %v668 = vpow.pop %v667
    %v669 = vsel %vm536, %v666, 0.0
    %670 = vadd.xlane.f32.xlu0 %v669
    %v671 = vpop.xlane.xlu0 %670
    %v672 = vsel %vm536, %v668, 0.0
    %673 = vadd.xlane.f32.xlu0 %v672
    %v674 = vpop.xlane.xlu0 %673
    %v675 = vrcp.pop %v671
    %v676 = vrcp.pop %v674
    %v677 = vmul.f32 %v666, %v675
    %v678 = vmul.f32 %v668, %v676
    %v679 = vpack.c.bf16 %v678, %v677
    %681 = vrot.lane.b32.xlu0 %v486, 120
    %v682 = vpop.permute.xlu0 %681
    %v685 = vsel %vm536, %v679, 0
    %687 = vmatprep.subr.bf16.mxu0 0
    %688 = vmatpush1.bf16.msra.mxu0 %v682
    %689 = vmatprep.subr.bf16.mxu0 0
    %690 = vmatpush1.bf16.msra.mxu0 0
    %691 = vmatprep.subr.bf16.mxu0 0
    %692 = vmatpush1.bf16.msra.mxu0 0
    %693 = vmatprep.subr.bf16.mxu0 0
    %694 = vmatpush1.bf16.msra.mxu0 0
    %695 = vmatprep.subr.bf16.mxu0 0
    %696 = vmatpush1.bf16.msra.mxu0 0
    %697 = vmatprep.subr.bf16.mxu0 0
    %698 = vmatpush1.bf16.msra.mxu0 0
    %699 = vmatprep.subr.bf16.mxu0 0
    %700 = vmatpush1.bf16.msra.mxu0 0
    %701 = vmatprep.subr.bf16.mxu0 0
    %702 = vmatpush1.bf16.msra.mxu0 0
    %703 = vmatprep.subr.bf16.mxu0 0
    %704 = vmatpush1.bf16.msra.mxu0 0
    %705 = vmatprep.subr.bf16.mxu0 0
    %706 = vmatpush1.bf16.msra.mxu0 0
    %707 = vmatprep.subr.bf16.mxu0 0
    %708 = vmatpush1.bf16.msra.mxu0 0
    %709 = vmatprep.subr.bf16.mxu0 0
    %710 = vmatpush1.bf16.msra.mxu0 0
    %711 = vmatprep.subr.bf16.mxu0 0
    %712 = vmatpush1.bf16.msra.mxu0 0
    %713 = vmatprep.subr.bf16.mxu0 0
    %714 = vmatpush1.bf16.msra.mxu0 0
    %715 = vmatprep.subr.bf16.mxu0 0
    %716 = vmatpush1.bf16.msra.mxu0 0
    %717 = vmatprep.subr.bf16.mxu0 0
    %718 = vmatpush1.bf16.msra.mxu0 0
    %719 = vmatprep.mubr.bf16.mxu0 0
    %720 = vmatmul.mubr.bf16.gmra.mrb[0].mxu0 %v685
    %v721 = vpop.f32.mrb[0].mxu0
    %v722 = vadd.f32 0.0, %v721
    %v723 = vpop.f32.mrb[0].mxu0
    %v724 = vpop.f32.mrb[0].mxu0
    %v725 = vadd.f32 0.0, %v724
    %v726 = vpop.f32.mrb[0].mxu0
    %727 = vdwg.mxu0
    %728 = vrot.lane.b32.xlu0 %v487, 112
    %v729 = vpop.permute.xlu0 %728
    %730 = vrot.lane.b32.xlu0 %v417, 112
    %v731 = vpop.permute.xlu0 %730
    %v733 = vsel %vm488, %v729, 0
    %v736 = vsel %vm488, %v731, 0
    %738 = vmatprep.subr.bf16.mxu0 0
    %739 = vmatpush1.bf16.xpose.msra.mxu0 %v736
    %740 = vmatprep.subr.bf16.mxu0 0
    %741 = vmatpush1.bf16.xpose.msra.mxu0 0
    %742 = vmatprep.subr.bf16.mxu0 0
    %743 = vmatpush1.bf16.xpose.msra.mxu0 0
    %744 = vmatprep.subr.bf16.mxu0 0
    %745 = vmatpush1.bf16.xpose.msra.mxu0 0
    %746 = vmatprep.subr.bf16.mxu0 0
    %747 = vmatpush1.bf16.xpose.msra.mxu0 0
    %748 = vmatprep.subr.bf16.mxu0 0
    %749 = vmatpush1.bf16.xpose.msra.mxu0 0
    %750 = vmatprep.subr.bf16.mxu0 0
    %751 = vmatpush1.bf16.xpose.msra.mxu0 0
    %752 = vmatprep.subr.bf16.mxu0 0
    %753 = vmatpush1.bf16.xpose.msra.mxu0 0
    %754 = vmatprep.subr.bf16.mxu0 0
    %755 = vmatpush1.bf16.xpose.msra.mxu0 0
    %756 = vmatprep.subr.bf16.mxu0 0
    %757 = vmatpush1.bf16.xpose.msra.mxu0 0
    %758 = vmatprep.subr.bf16.mxu0 0
    %759 = vmatpush1.bf16.xpose.msra.mxu0 0
    %760 = vmatprep.subr.bf16.mxu0 0
    %761 = vmatpush1.bf16.xpose.msra.mxu0 0
    %762 = vmatprep.subr.bf16.mxu0 0
    %763 = vmatpush1.bf16.xpose.msra.mxu0 0
    %764 = vmatprep.subr.bf16.mxu0 0
    %765 = vmatpush1.bf16.xpose.msra.mxu0 0
    %766 = vmatprep.subr.bf16.mxu0 0
    %767 = vmatpush1.bf16.xpose.msra.mxu0 0
    %768 = vmatprep.subr.bf16.mxu0 0
    %769 = vmatpush1.bf16.xpose.msra.mxu0 0
    %770 = vmatprep.mubr.bf16.mxu0 0
    %771 = vmatmul.mubr.bf16.gmra.mrb[0].mxu0 %v733
    %v772 = vpop.f32.mrb[0].mxu0
    %v773 = vadd.f32 %v94, %v772
    %v774 = vpop.f32.mrb[0].mxu0
    %v775 = vpop.f32.mrb[0].mxu0
    %v776 = vadd.f32 %v95, %v775
    %v777 = vpop.f32.mrb[0].mxu0
    %778 = vdwg.mxu0
    %v779 = vsel %vm536, %v773, -inf
    %780 = vmax.xlane.f32.xlu0 %v779
    %v781 = vpop.xlane.xlu0 %780
    %v782 = vsel %vm536, %v776, -inf
    %783 = vmax.xlane.f32.xlu0 %v782
    %v784 = vpop.xlane.xlu0 %783
    %v785 = vsub.f32 %v773, %v781
    %v786 = vsub.f32 %v776, %v784
    %v787 = vmul.f32 %v785, 1.442695
    %v788 = vpow.pop %v787
    %v789 = vmul.f32 %v786, 1.442695
    %v790 = vpow.pop %v789
    %v791 = vsel %vm536, %v788, 0.0
    %792 = vadd.xlane.f32.xlu0 %v791
    %v793 = vpop.xlane.xlu0 %792
    %v794 = vsel %vm536, %v790, 0.0
    %795 = vadd.xlane.f32.xlu0 %v794
    %v796 = vpop.xlane.xlu0 %795
    %v797 = vrcp.pop %v793
    %v798 = vrcp.pop %v796
    %v799 = vmul.f32 %v788, %v797
    %v800 = vmul.f32 %v790, %v798
    %v801 = vpack.c.bf16 %v800, %v799
    %802 = vrot.lane.b32.xlu0 %v486, 112
    %v803 = vpop.permute.xlu0 %802
    %v806 = vsel %vm536, %v801, 0
    %808 = vmatprep.subr.bf16.mxu0 0
    %809 = vmatpush1.bf16.msra.mxu0 %v803
    %810 = vmatprep.subr.bf16.mxu0 0
    %811 = vmatpush1.bf16.msra.mxu0 0
    %812 = vmatprep.subr.bf16.mxu0 0
    %813 = vmatpush1.bf16.msra.mxu0 0
    %814 = vmatprep.subr.bf16.mxu0 0
    %815 = vmatpush1.bf16.msra.mxu0 0
    %816 = vmatprep.subr.bf16.mxu0 0
    %817 = vmatpush1.bf16.msra.mxu0 0
    %818 = vmatprep.subr.bf16.mxu0 0
    %819 = vmatpush1.bf16.msra.mxu0 0
    %820 = vmatprep.subr.bf16.mxu0 0
    %821 = vmatpush1.bf16.msra.mxu0 0
    %822 = vmatprep.subr.bf16.mxu0 0
    %823 = vmatpush1.bf16.msra.mxu0 0
    %824 = vmatprep.subr.bf16.mxu0 0
    %825 = vmatpush1.bf16.msra.mxu0 0
    %826 = vmatprep.subr.bf16.mxu0 0
    %827 = vmatpush1.bf16.msra.mxu0 0
    %828 = vmatprep.subr.bf16.mxu0 0
    %829 = vmatpush1.bf16.msra.mxu0 0
    %830 = vmatprep.subr.bf16.mxu0 0
    %831 = vmatpush1.bf16.msra.mxu0 0
    %832 = vmatprep.subr.bf16.mxu0 0
    %833 = vmatpush1.bf16.msra.mxu0 0
    %834 = vmatprep.subr.bf16.mxu0 0
    %835 = vmatpush1.bf16.msra.mxu0 0
    %836 = vmatprep.subr.bf16.mxu0 0
    %837 = vmatpush1.bf16.msra.mxu0 0
    %838 = vmatprep.subr.bf16.mxu0 0
    %839 = vmatpush1.bf16.msra.mxu0 0
    %840 = vmatprep.mubr.bf16.mxu0 0
    %841 = vmatmul.mubr.bf16.gmra.mrb[0].mxu0 %v806
    %v842 = vpop.f32.mrb[0].mxu0
    %v843 = vadd.f32 0.0, %v842
    %v844 = vpop.f32.mrb[0].mxu0
    %v845 = vpop.f32.mrb[0].mxu0
    %v846 = vadd.f32 0.0, %v845
    %v847 = vpop.f32.mrb[0].mxu0
    %848 = vdwg.mxu0
    %849 = vrot.lane.b32.xlu0 %v487, 104
    %v850 = vpop.permute.xlu0 %849
    %851 = vrot.lane.b32.xlu0 %v417, 104
    %v852 = vpop.permute.xlu0 %851
    %v854 = vsel %vm488, %v850, 0
    %v857 = vsel %vm488, %v852, 0
    %859 = vmatprep.subr.bf16.mxu0 0
    %860 = vmatpush1.bf16.xpose.msra.mxu0 %v857
    %861 = vmatprep.subr.bf16.mxu0 0
    %862 = vmatpush1.bf16.xpose.msra.mxu0 0
    %863 = vmatprep.subr.bf16.mxu0 0
    %864 = vmatpush1.bf16.xpose.msra.mxu0 0
    %865 = vmatprep.subr.bf16.mxu0 0
    %866 = vmatpush1.bf16.xpose.msra.mxu0 0
    %867 = vmatprep.subr.bf16.mxu0 0
    %868 = vmatpush1.bf16.xpose.msra.mxu0 0
    %869 = vmatprep.subr.bf16.mxu0 0
    %870 = vmatpush1.bf16.xpose.msra.mxu0 0
    %871 = vmatprep.subr.bf16.mxu0 0
    %872 = vmatpush1.bf16.xpose.msra.mxu0 0
    %873 = vmatprep.subr.bf16.mxu0 0
    %874 = vmatpush1.bf16.xpose.msra.mxu0 0
    %875 = vmatprep.subr.bf16.mxu0 0
    %876 = vmatpush1.bf16.xpose.msra.mxu0 0
    %877 = vmatprep.subr.bf16.mxu0 0
    %878 = vmatpush1.bf16.xpose.msra.mxu0 0
    %879 = vmatprep.subr.bf16.mxu0 0
    %880 = vmatpush1.bf16.xpose.msra.mxu0 0
    %881 = vmatprep.subr.bf16.mxu0 0
    %882 = vmatpush1.bf16.xpose.msra.mxu0 0
    %883 = vmatprep.subr.bf16.mxu0 0
    %884 = vmatpush1.bf16.xpose.msra.mxu0 0
    %885 = vmatprep.subr.bf16.mxu0 0
    %886 = vmatpush1.bf16.xpose.msra.mxu0 0
    %887 = vmatprep.subr.bf16.mxu0 0
    %888 = vmatpush1.bf16.xpose.msra.mxu0 0
    %889 = vmatprep.subr.bf16.mxu0 0
    %890 = vmatpush1.bf16.xpose.msra.mxu0 0
    %891 = vmatprep.mubr.bf16.mxu0 0
    %892 = vmatmul.mubr.bf16.gmra.mrb[0].mxu0 %v854
    %v893 = vpop.f32.mrb[0].mxu0
    %v894 = vadd.f32 %v94, %v893
    %v895 = vpop.f32.mrb[0].mxu0
    %v896 = vpop.f32.mrb[0].mxu0
    %v897 = vadd.f32 %v95, %v896
    %v898 = vpop.f32.mrb[0].mxu0
    %899 = vdwg.mxu0
    %v900 = vsel %vm536, %v894, -inf
    %901 = vmax.xlane.f32.xlu0 %v900
    %v902 = vpop.xlane.xlu0 %901
    %v903 = vsel %vm536, %v897, -inf
    %904 = vmax.xlane.f32.xlu0 %v903
    %v905 = vpop.xlane.xlu0 %904
    %v906 = vsub.f32 %v894, %v902
    %v907 = vsub.f32 %v897, %v905
    %v908 = vmul.f32 %v906, 1.442695
    %v909 = vpow.pop %v908
    %v910 = vmul.f32 %v907, 1.442695
    %v911 = vpow.pop %v910
    %v912 = vsel %vm536, %v909, 0.0
    %913 = vadd.xlane.f32.xlu0 %v912
    %v914 = vpop.xlane.xlu0 %913
    %v915 = vsel %vm536, %v911, 0.0
    %916 = vadd.xlane.f32.xlu0 %v915
    %v917 = vpop.xlane.xlu0 %916
    %v918 = vrcp.pop %v914
    %v919 = vrcp.pop %v917
    %v920 = vmul.f32 %v909, %v918
    %v921 = vmul.f32 %v911, %v919
    %v922 = vpack.c.bf16 %v921, %v920
    %923 = vrot.lane.b32.xlu0 %v486, 104
    %v924 = vpop.permute.xlu0 %923
    %v927 = vsel %vm536, %v922, 0
    %929 = vmatprep.subr.bf16.mxu0 0
    %930 = vmatpush1.bf16.msra.mxu0 %v924
    %931 = vmatprep.subr.bf16.mxu0 0
    %932 = vmatpush1.bf16.msra.mxu0 0
    %933 = vmatprep.subr.bf16.mxu0 0
    %934 = vmatpush1.bf16.msra.mxu0 0
    %935 = vmatprep.subr.bf16.mxu0 0
    %936 = vmatpush1.bf16.msra.mxu0 0
    %937 = vmatprep.subr.bf16.mxu0 0
    %938 = vmatpush1.bf16.msra.mxu0 0
    %939 = vmatprep.subr.bf16.mxu0 0
    %940 = vmatpush1.bf16.msra.mxu0 0
    %941 = vmatprep.subr.bf16.mxu0 0
    %942 = vmatpush1.bf16.msra.mxu0 0
    %943 = vmatprep.subr.bf16.mxu0 0
    %944 = vmatpush1.bf16.msra.mxu0 0
    %945 = vmatprep.subr.bf16.mxu0 0
    %946 = vmatpush1.bf16.msra.mxu0 0
    %947 = vmatprep.subr.bf16.mxu0 0
    %948 = vmatpush1.bf16.msra.mxu0 0
    %949 = vmatprep.subr.bf16.mxu0 0
    %950 = vmatpush1.bf16.msra.mxu0 0
    %951 = vmatprep.subr.bf16.mxu0 0
    %952 = vmatpush1.bf16.msra.mxu0 0
    %953 = vmatprep.subr.bf16.mxu0 0
    %954 = vmatpush1.bf16.msra.mxu0 0
    %955 = vmatprep.subr.bf16.mxu0 0
    %956 = vmatpush1.bf16.msra.mxu0 0
    %957 = vmatprep.subr.bf16.mxu0 0
    %958 = vmatpush1.bf16.msra.mxu0 0
    %959 = vmatprep.subr.bf16.mxu0 0
    %960 = vmatpush1.bf16.msra.mxu0 0
    %961 = vmatprep.mubr.bf16.mxu0 0
    %962 = vmatmul.mubr.bf16.gmra.mrb[0].mxu0 %v927
    %v963 = vpop.f32.mrb[0].mxu0
    %v964 = vadd.f32 0.0, %v963
    %v965 = vpop.f32.mrb[0].mxu0
    %v966 = vpop.f32.mrb[0].mxu0
    %v967 = vadd.f32 0.0, %v966
    %v968 = vpop.f32.mrb[0].mxu0
    %969 = vdwg.mxu0
    %972 = vrot.lane.b32.xlu0 %v722, 8
    %v973 = vpop.permute.xlu0 %972
    %974 = vrot.lane.b32.xlu0 %v725, 8
    %v975 = vpop.permute.xlu0 %974
    %980 = vrot.lane.b32.xlu0 %v843, 16
    %v981 = vpop.permute.xlu0 %980
    %982 = vrot.lane.b32.xlu0 %v846, 16
    %v983 = vpop.permute.xlu0 %982
    %988 = vrot.lane.b32.xlu0 %v964, 24
    %v989 = vpop.permute.xlu0 %988
    %990 = vrot.lane.b32.xlu0 %v967, 24
    %v991 = vpop.permute.xlu0 %990
    %v994 = vsel %vm488, %v598, %v973
    %v995 = vsel %vm488, %v601, %v975
    %v996 = vsel %vm536, %v994, %v981
    %v997 = vsel %vm536, %v995, %v983
    %vm998 = vcmask 195584
    %v999 = vsel %vm998, %v996, %v989
    %v1000 = vsel %vm998, %v997, %v991
    %v1001 = vpack.c.bf16 %v1000, %v999
    %v1002 = vld [vmem:[%s12] sm:$0xf]
    %v1003 = vld [vmem:[%s12 + $0x4] sm:$0xf]
    %v1004 = vld [vmem:[%s12 + $0x8] sm:$0xf]
    %v1005 = vld [vmem:[%s12 + $0xc] sm:$0xf]
    %v1006 = vld [vmem:[%s13] sm:$0x1]
    %v1008 = vlaneseq
    %v1009 = vshrl.u32 %v1008, 7
    %v1010 = vsub.s32 0, %v1009
    %v1011 = vrot.slane %v1006, %v1010
    %v1017 = vunpack.c.l.b16 %v1002
    %v1018 = vunpack.c.l.b16 %v1003
    %v1019 = vunpack.c.l.b16 %v1004
    %v1020 = vunpack.c.l.b16 %v1005
    %v1021 = vpack.c.b16 %v1018, %v1017
    %v1022 = vpack.c.b16 %v1020, %v1019
    %v1026 = vsel %vm135, %v1001, 0
    %1028 = vmatprep.subr.bf16.mxu0 0
    %1029 = vmatpush1.bf16.msra.mxu0 %v1021
    %1030 = vmatprep.subr.bf16.mxu0 0
    %1031 = vmatpush1.bf16.msra.mxu0 %v1022
    %1032 = vmatprep.subr.bf16.mxu0 0
    %1033 = vmatpush1.bf16.msra.mxu0 0
    %1034 = vmatprep.subr.bf16.mxu0 0
    %1035 = vmatpush1.bf16.msra.mxu0 0
    %1036 = vmatprep.subr.bf16.mxu0 0
    %1037 = vmatpush1.bf16.msra.mxu0 0
    %1038 = vmatprep.subr.bf16.mxu0 0
    %1039 = vmatpush1.bf16.msra.mxu0 0
    %1040 = vmatprep.subr.bf16.mxu0 0
    %1041 = vmatpush1.bf16.msra.mxu0 0
    %1042 = vmatprep.subr.bf16.mxu0 0
    %1043 = vmatpush1.bf16.msra.mxu0 0
    %1044 = vmatprep.subr.bf16.mxu0 0
    %1045 = vmatpush1.bf16.msra.mxu0 0
    %1046 = vmatprep.subr.bf16.mxu0 0
    %1047 = vmatpush1.bf16.msra.mxu0 0
    %1048 = vmatprep.subr.bf16.mxu0 0
    %1049 = vmatpush1.bf16.msra.mxu0 0
    %1050 = vmatprep.subr.bf16.mxu0 0
    %1051 = vmatpush1.bf16.msra.mxu0 0
    %1052 = vmatprep.subr.bf16.mxu0 0
    %1053 = vmatpush1.bf16.msra.mxu0 0
    %1054 = vmatprep.subr.bf16.mxu0 0
    %1055 = vmatpush1.bf16.msra.mxu0 0
    %1056 = vmatprep.subr.bf16.mxu0 0
    %1057 = vmatpush1.bf16.msra.mxu0 0
    %1058 = vmatprep.subr.bf16.mxu0 0
    %1059 = vmatpush1.bf16.msra.mxu0 0
    %1060 = vmatprep.mubr.bf16.mxu0 0
    %1061 = vmatmul.mubr.bf16.gmra.mrb[0].mxu0 %v1026
    %v1062 = vpop.f32.mrb[0].mxu0
    %v1063 = vadd.f32 %v1011, %v1062
    %v1064 = vpop.f32.mrb[0].mxu0
    %v1065 = vpop.f32.mrb[0].mxu0
    %v1066 = vadd.f32 %v1011, %v1065
    %v1067 = vpop.f32.mrb[0].mxu0
    %1068 = vdwg.mxu0
    %v1069 = vadd.f32 %v281, %v1063
    %v1070 = vadd.f32 %v282, %v1066
    %v1071 = vld [vmem:[%s26] sm:$0x1]
    %v1072 = vld [vmem:[%s27] sm:$0x1]
    %v1073 = vsel %vm135, %v1069, 0.0
    %1074 = vadd.xlane.f32.xlu0 %v1073
    %v1075 = vpop.xlane.xlu0 %1074
    %v1076 = vsel %vm135, %v1070, 0.0
    %1077 = vadd.xlane.f32.xlu0 %v1076
    %v1078 = vpop.xlane.xlu0 %1077
    %v1079 = vrcp.pop 32.0
    %v1080 = vmul.f32 %v1075, %v1079
    %v1081 = vmul.f32 %v1078, %v1079
    %v1082 = vsub.f32 %v1069, %v1080
    %v1083 = vsub.f32 %v1070, %v1081
    %v1084 = vmul.f32 %v1082, %v1082
    %v1085 = vmul.f32 %v1083, %v1083
    %v1086 = vsel %vm135, %v1084, 0.0
    %1087 = vadd.xlane.f32.xlu0 %v1086
    %v1088 = vpop.xlane.xlu0 %1087
    %v1089 = vsel %vm135, %v1085, 0.0
    %1090 = vadd.xlane.f32.xlu0 %v1089
    %v1091 = vpop.xlane.xlu0 %1090
    %v1092 = vmul.f32 %v1088, %v1079
    %v1093 = vmul.f32 %v1091, %v1079
    %v1094 = vadd.f32 %v1092, 1e-05
    %v1095 = vadd.f32 %v1093, 1e-05
    %v1096 = vrsqrt.pop %v1094
    %v1097 = vrsqrt.pop %v1095
    %v1098 = vmul.f32 %v1082, %v1096
    %v1099 = vmul.f32 %v1083, %v1097
    %v1100 = vlaneseq
    %v1101 = vshrl.u32 %v1100, 7
    %v1102 = vsub.s32 0, %v1101
    %v1103 = vrot.slane %v1071, %v1102
    %v1104 = vmul.f32 %v1098, %v1103
    %v1105 = vmul.f32 %v1099, %v1103
    %v1106 = vlaneseq
    %v1107 = vshrl.u32 %v1106, 7
    %v1108 = vsub.s32 0, %v1107
    %v1109 = vrot.slane %v1072, %v1108
    %v1110 = vadd.f32 %v1104, %v1109
    %v1111 = vadd.f32 %v1105, %v1109
    %v1112 = vadd.f32 %v1110, %v92
    %v1113 = vadd.f32 %v1111, %v93
    %v1114 = vpack.c.bf16 %v1113, %v1112
    %v1115 = vld [vmem:[%s14] sm:$0xf]
    %v1116 = vld [vmem:[%s14 + $0x4] sm:$0xf]
    %v1117 = vld [vmem:[%s14 + $0x8] sm:$0xf]
    %v1118 = vld [vmem:[%s14 + $0xc] sm:$0xf]
    %v1119 = vld [vmem:[%s15] sm:$0x1]
    %v1121 = vlaneseq
    %v1122 = vshrl.u32 %v1121, 7
    %v1123 = vsub.s32 0, %v1122
    %v1124 = vrot.slane %v1119, %v1123
    %v1130 = vunpack.c.l.b16 %v1115
    %v1131 = vunpack.c.l.b16 %v1116
    %v1132 = vunpack.c.l.b16 %v1117
    %v1133 = vunpack.c.l.b16 %v1118
    %v1134 = vpack.c.b16 %v1131, %v1130
    %v1135 = vpack.c.b16 %v1133, %v1132
    %v1139 = vsel %vm135, %v1114, 0
    %1141 = vmatprep.subr.bf16.mxu0 0
    %1142 = vmatpush1.bf16.msra.mxu0 %v1134
    %1143 = vmatprep.subr.bf16.mxu0 0
    %1144 = vmatpush1.bf16.msra.mxu0 %v1135
    %1145 = vmatprep.subr.bf16.mxu0 0
    %1146 = vmatpush1.bf16.msra.mxu0 0
    %1147 = vmatprep.subr.bf16.mxu0 0
    %1148 = vmatpush1.bf16.msra.mxu0 0
    %1149 = vmatprep.subr.bf16.mxu0 0
    %1150 = vmatpush1.bf16.msra.mxu0 0
    %1151 = vmatprep.subr.bf16.mxu0 0
    %1152 = vmatpush1.bf16.msra.mxu0 0
    %1153 = vmatprep.subr.bf16.mxu0 0
    %1154 = vmatpush1.bf16.msra.mxu0 0
    %1155 = vmatprep.subr.bf16.mxu0 0
    %1156 = vmatpush1.bf16.msra.mxu0 0
    %1157 = vmatprep.subr.bf16.mxu0 0
    %1158 = vmatpush1.bf16.msra.mxu0 0
    %1159 = vmatprep.subr.bf16.mxu0 0
    %1160 = vmatpush1.bf16.msra.mxu0 0
    %1161 = vmatprep.subr.bf16.mxu0 0
    %1162 = vmatpush1.bf16.msra.mxu0 0
    %1163 = vmatprep.subr.bf16.mxu0 0
    %1164 = vmatpush1.bf16.msra.mxu0 0
    %1165 = vmatprep.subr.bf16.mxu0 0
    %1166 = vmatpush1.bf16.msra.mxu0 0
    %1167 = vmatprep.subr.bf16.mxu0 0
    %1168 = vmatpush1.bf16.msra.mxu0 0
    %1169 = vmatprep.subr.bf16.mxu0 0
    %1170 = vmatpush1.bf16.msra.mxu0 0
    %1171 = vmatprep.subr.bf16.mxu0 0
    %1172 = vmatpush1.bf16.msra.mxu0 0
    %1173 = vmatprep.mubr.bf16.mxu0 0
    %1174 = vmatmul.mubr.bf16.gmra.mrb[0].mxu0 %v1139
    %v1175 = vpop.f32.mrb[0].mxu0
    %v1176 = vadd.f32 %v1124, %v1175
    %v1177 = vpop.f32.mrb[0].mxu0
    %v1178 = vpop.f32.mrb[0].mxu0
    %v1179 = vadd.f32 %v1124, %v1178
    %v1180 = vpop.f32.mrb[0].mxu0
    %1181 = vdwg.mxu0
    %v1182 = vpack.c.bf16 %v1179, %v1176
    %v1184 = vsel %vm488, %v1182, 0
    %v1187 = vsel %vm488, %v191, 0
    %v1190 = vsel %vm488, %v192, 0
    %1192 = vmatprep.subr.bf16.mxu0 0
    %1193 = vmatpush1.bf16.xpose.msra.mxu0 %v1187
    %1194 = vmatprep.subr.bf16.mxu0 0
    %1195 = vmatpush1.bf16.xpose.msra.mxu0 %v1190
    %1196 = vmatprep.subr.bf16.mxu0 0
    %1197 = vmatpush1.bf16.xpose.msra.mxu0 0
    %1198 = vmatprep.subr.bf16.mxu0 0
    %1199 = vmatpush1.bf16.xpose.msra.mxu0 0
    %1200 = vmatprep.subr.bf16.mxu0 0
    %1201 = vmatpush1.bf16.xpose.msra.mxu0 0
    %1202 = vmatprep.subr.bf16.mxu0 0
    %1203 = vmatpush1.bf16.xpose.msra.mxu0 0
    %1204 = vmatprep.subr.bf16.mxu0 0
    %1205 = vmatpush1.bf16.xpose.msra.mxu0 0
    %1206 = vmatprep.subr.bf16.mxu0 0
    %1207 = vmatpush1.bf16.xpose.msra.mxu0 0
    %1208 = vmatprep.subr.bf16.mxu0 0
    %1209 = vmatpush1.bf16.xpose.msra.mxu0 0
    %1210 = vmatprep.subr.bf16.mxu0 0
    %1211 = vmatpush1.bf16.xpose.msra.mxu0 0
    %1212 = vmatprep.subr.bf16.mxu0 0
    %1213 = vmatpush1.bf16.xpose.msra.mxu0 0
    %1214 = vmatprep.subr.bf16.mxu0 0
    %1215 = vmatpush1.bf16.xpose.msra.mxu0 0
    %1216 = vmatprep.subr.bf16.mxu0 0
    %1217 = vmatpush1.bf16.xpose.msra.mxu0 0
    %1218 = vmatprep.subr.bf16.mxu0 0
    %1219 = vmatpush1.bf16.xpose.msra.mxu0 0
    %1220 = vmatprep.subr.bf16.mxu0 0
    %1221 = vmatpush1.bf16.xpose.msra.mxu0 0
    %1222 = vmatprep.subr.bf16.mxu0 0
    %1223 = vmatpush1.bf16.xpose.msra.mxu0 0
    %1224 = vmatprep.mubr.bf16.mxu0 0
    %1225 = vmatmul.mubr.bf16.gmra.mrb[0].mxu0 %v1184
    %v1226 = vpop.f32.mrb[0].mxu0
    %v1227 = vadd.f32 %v96, %v1226
    %v1228 = vpop.f32.mrb[0].mxu0
    %v1229 = vpop.f32.mrb[0].mxu0
    %v1230 = vadd.f32 %v97, %v1229
    %v1231 = vpop.f32.mrb[0].mxu0
    %1232 = vdwg.mxu0
    %v1233 = vsel %vm135, %v1227, -inf
    %1234 = vmax.xlane.f32.xlu0 %v1233
    %v1235 = vpop.xlane.xlu0 %1234
    %v1236 = vsel %vm135, %v1230, -inf
    %1237 = vmax.xlane.f32.xlu0 %v1236
    %v1238 = vpop.xlane.xlu0 %1237
    %v1239 = vsub.f32 %v1227, %v1235
    %v1240 = vsub.f32 %v1230, %v1238
    %v1241 = vmul.f32 %v1239, 1.442695
    %v1242 = vpow.pop %v1241
    %v1243 = vmul.f32 %v1240, 1.442695
    %v1244 = vpow.pop %v1243
    %v1245 = vsel %vm135, %v1242, 0.0
    %1246 = vadd.xlane.f32.xlu0 %v1245
    %v1247 = vpop.xlane.xlu0 %1246
    %v1248 = vsel %vm135, %v1244, 0.0
    %1249 = vadd.xlane.f32.xlu0 %v1248
    %v1250 = vpop.xlane.xlu0 %1249
    %v1251 = vrcp.pop %v1247
    %v1252 = vrcp.pop %v1250
    %v1253 = vmul.f32 %v1242, %v1251
    %v1254 = vmul.f32 %v1244, %v1252
    %v1255 = vpack.c.bf16 %v1254, %v1253
    %v1257 = vsel %vm135, %v1255, 0
    %1259 = vmatprep.subr.bf16.mxu0 0
    %1260 = vmatpush1.bf16.msra.mxu0 %v273
    %1261 = vmatprep.subr.bf16.mxu0 0
    %1262 = vmatpush1.bf16.msra.mxu0 %v274
    %1263 = vmatprep.subr.bf16.mxu0 0
    %1264 = vmatpush1.bf16.msra.mxu0 0
    %1265 = vmatprep.subr.bf16.mxu0 0
    %1266 = vmatpush1.bf16.msra.mxu0 0
    %1267 = vmatprep.subr.bf16.mxu0 0
    %1268 = vmatpush1.bf16.msra.mxu0 0
    %1269 = vmatprep.subr.bf16.mxu0 0
    %1270 = vmatpush1.bf16.msra.mxu0 0
    %1271 = vmatprep.subr.bf16.mxu0 0
    %1272 = vmatpush1.bf16.msra.mxu0 0
    %1273 = vmatprep.subr.bf16.mxu0 0
    %1274 = vmatpush1.bf16.msra.mxu0 0
    %1275 = vmatprep.subr.bf16.mxu0 0
    %1276 = vmatpush1.bf16.msra.mxu0 0
    %1277 = vmatprep.subr.bf16.mxu0 0
    %1278 = vmatpush1.bf16.msra.mxu0 0
    %1279 = vmatprep.subr.bf16.mxu0 0
    %1280 = vmatpush1.bf16.msra.mxu0 0
    %1281 = vmatprep.subr.bf16.mxu0 0
    %1282 = vmatpush1.bf16.msra.mxu0 0
    %1283 = vmatprep.subr.bf16.mxu0 0
    %1284 = vmatpush1.bf16.msra.mxu0 0
    %1285 = vmatprep.subr.bf16.mxu0 0
    %1286 = vmatpush1.bf16.msra.mxu0 0
    %1287 = vmatprep.subr.bf16.mxu0 0
    %1288 = vmatpush1.bf16.msra.mxu0 0
    %1289 = vmatprep.subr.bf16.mxu0 0
    %1290 = vmatpush1.bf16.msra.mxu0 0
    %1291 = vmatprep.mubr.bf16.mxu0 0
    %1292 = vmatmul.mubr.bf16.gmra.mrb[0].mxu0 %v1257
    %v1293 = vpop.f32.mrb[0].mxu0
    %v1294 = vadd.f32 0.0, %v1293
    %v1295 = vpop.f32.mrb[0].mxu0
    %v1296 = vpop.f32.mrb[0].mxu0
    %v1297 = vadd.f32 0.0, %v1296
    %v1298 = vpop.f32.mrb[0].mxu0
    %1299 = vdwg.mxu0
    %1301 = vrot.lane.b32.xlu0 %v1182, 120
    %v1302 = vpop.permute.xlu0 %1301
    %1305 = vrot.lane.b32.xlu0 %v191, 120
    %v1306 = vpop.permute.xlu0 %1305
    %1307 = vrot.lane.b32.xlu0 %v192, 120
    %v1308 = vpop.permute.xlu0 %1307
    %v1310 = vsel %vm488, %v1302, 0
    %v1313 = vsel %vm488, %v1306, 0
    %v1316 = vsel %vm488, %v1308, 0
    %1318 = vmatprep.subr.bf16.mxu0 0
    %1319 = vmatpush1.bf16.xpose.msra.mxu0 %v1313
    %1320 = vmatprep.subr.bf16.mxu0 0
    %1321 = vmatpush1.bf16.xpose.msra.mxu0 %v1316
    %1322 = vmatprep.subr.bf16.mxu0 0
    %1323 = vmatpush1.bf16.xpose.msra.mxu0 0
    %1324 = vmatprep.subr.bf16.mxu0 0
    %1325 = vmatpush1.bf16.xpose.msra.mxu0 0
    %1326 = vmatprep.subr.bf16.mxu0 0
    %1327 = vmatpush1.bf16.xpose.msra.mxu0 0
    %1328 = vmatprep.subr.bf16.mxu0 0
    %1329 = vmatpush1.bf16.xpose.msra.mxu0 0
    %1330 = vmatprep.subr.bf16.mxu0 0
    %1331 = vmatpush1.bf16.xpose.msra.mxu0 0
    %1332 = vmatprep.subr.bf16.mxu0 0
    %1333 = vmatpush1.bf16.xpose.msra.mxu0 0
    %1334 = vmatprep.subr.bf16.mxu0 0
    %1335 = vmatpush1.bf16.xpose.msra.mxu0 0
    %1336 = vmatprep.subr.bf16.mxu0 0
    %1337 = vmatpush1.bf16.xpose.msra.mxu0 0
    %1338 = vmatprep.subr.bf16.mxu0 0
    %1339 = vmatpush1.bf16.xpose.msra.mxu0 0
    %1340 = vmatprep.subr.bf16.mxu0 0
    %1341 = vmatpush1.bf16.xpose.msra.mxu0 0
    %1342 = vmatprep.subr.bf16.mxu0 0
    %1343 = vmatpush1.bf16.xpose.msra.mxu0 0
    %1344 = vmatprep.subr.bf16.mxu0 0
    %1345 = vmatpush1.bf16.xpose.msra.mxu0 0
    %1346 = vmatprep.subr.bf16.mxu0 0
    %1347 = vmatpush1.bf16.xpose.msra.mxu0 0
    %1348 = vmatprep.subr.bf16.mxu0 0
    %1349 = vmatpush1.bf16.xpose.msra.mxu0 0
    %1350 = vmatprep.mubr.bf16.mxu0 0
    %1351 = vmatmul.mubr.bf16.gmra.mrb[0].mxu0 %v1310
    %v1352 = vpop.f32.mrb[0].mxu0
    %v1353 = vadd.f32 %v96, %v1352
    %v1354 = vpop.f32.mrb[0].mxu0
    %v1355 = vpop.f32.mrb[0].mxu0
    %v1356 = vadd.f32 %v97, %v1355
    %v1357 = vpop.f32.mrb[0].mxu0
    %1358 = vdwg.mxu0
    %v1359 = vsel %vm135, %v1353, -inf
    %1360 = vmax.xlane.f32.xlu0 %v1359
    %v1361 = vpop.xlane.xlu0 %1360
    %v1362 = vsel %vm135, %v1356, -inf
    %1363 = vmax.xlane.f32.xlu0 %v1362
    %v1364 = vpop.xlane.xlu0 %1363
    %v1365 = vsub.f32 %v1353, %v1361
    %v1366 = vsub.f32 %v1356, %v1364
    %v1367 = vmul.f32 %v1365, 1.442695
    %v1368 = vpow.pop %v1367
    %v1369 = vmul.f32 %v1366, 1.442695
    %v1370 = vpow.pop %v1369
    %v1371 = vsel %vm135, %v1368, 0.0
    %1372 = vadd.xlane.f32.xlu0 %v1371
    %v1373 = vpop.xlane.xlu0 %1372
    %v1374 = vsel %vm135, %v1370, 0.0
    %1375 = vadd.xlane.f32.xlu0 %v1374
    %v1376 = vpop.xlane.xlu0 %1375
    %v1377 = vrcp.pop %v1373
    %v1378 = vrcp.pop %v1376
    %v1379 = vmul.f32 %v1368, %v1377
    %v1380 = vmul.f32 %v1370, %v1378
    %v1381 = vpack.c.bf16 %v1380, %v1379
    %1384 = vrot.lane.b32.xlu0 %v273, 120
    %v1385 = vpop.permute.xlu0 %1384
    %1386 = vrot.lane.b32.xlu0 %v274, 120
    %v1387 = vpop.permute.xlu0 %1386
    %v1391 = vsel %vm135, %v1381, 0
    %1393 = vmatprep.subr.bf16.mxu0 0
    %1394 = vmatpush1.bf16.msra.mxu0 %v1385
    %1395 = vmatprep.subr.bf16.mxu0 0
    %1396 = vmatpush1.bf16.msra.mxu0 %v1387
    %1397 = vmatprep.subr.bf16.mxu0 0
    %1398 = vmatpush1.bf16.msra.mxu0 0
    %1399 = vmatprep.subr.bf16.mxu0 0
    %1400 = vmatpush1.bf16.msra.mxu0 0
    %1401 = vmatprep.subr.bf16.mxu0 0
    %1402 = vmatpush1.bf16.msra.mxu0 0
    %1403 = vmatprep.subr.bf16.mxu0 0
    %1404 = vmatpush1.bf16.msra.mxu0 0
    %1405 = vmatprep.subr.bf16.mxu0 0
    %1406 = vmatpush1.bf16.msra.mxu0 0
    %1407 = vmatprep.subr.bf16.mxu0 0
    %1408 = vmatpush1.bf16.msra.mxu0 0
    %1409 = vmatprep.subr.bf16.mxu0 0
    %1410 = vmatpush1.bf16.msra.mxu0 0
    %1411 = vmatprep.subr.bf16.mxu0 0
    %1412 = vmatpush1.bf16.msra.mxu0 0
    %1413 = vmatprep.subr.bf16.mxu0 0
    %1414 = vmatpush1.bf16.msra.mxu0 0
    %1415 = vmatprep.subr.bf16.mxu0 0
    %1416 = vmatpush1.bf16.msra.mxu0 0
    %1417 = vmatprep.subr.bf16.mxu0 0
    %1418 = vmatpush1.bf16.msra.mxu0 0
    %1419 = vmatprep.subr.bf16.mxu0 0
    %1420 = vmatpush1.bf16.msra.mxu0 0
    %1421 = vmatprep.subr.bf16.mxu0 0
    %1422 = vmatpush1.bf16.msra.mxu0 0
    %1423 = vmatprep.subr.bf16.mxu0 0
    %1424 = vmatpush1.bf16.msra.mxu0 0
    %1425 = vmatprep.mubr.bf16.mxu0 0
    %1426 = vmatmul.mubr.bf16.gmra.mrb[0].mxu0 %v1391
    %v1427 = vpop.f32.mrb[0].mxu0
    %v1428 = vadd.f32 0.0, %v1427
    %v1429 = vpop.f32.mrb[0].mxu0
    %v1430 = vpop.f32.mrb[0].mxu0
    %v1431 = vadd.f32 0.0, %v1430
    %v1432 = vpop.f32.mrb[0].mxu0
    %1433 = vdwg.mxu0
    %1434 = vrot.lane.b32.xlu0 %v1182, 112
    %v1435 = vpop.permute.xlu0 %1434
    %1436 = vrot.lane.b32.xlu0 %v191, 112
    %v1437 = vpop.permute.xlu0 %1436
    %1438 = vrot.lane.b32.xlu0 %v192, 112
    %v1439 = vpop.permute.xlu0 %1438
    %v1441 = vsel %vm488, %v1435, 0
    %v1444 = vsel %vm488, %v1437, 0
    %v1447 = vsel %vm488, %v1439, 0
    %1449 = vmatprep.subr.bf16.mxu0 0
    %1450 = vmatpush1.bf16.xpose.msra.mxu0 %v1444
    %1451 = vmatprep.subr.bf16.mxu0 0
    %1452 = vmatpush1.bf16.xpose.msra.mxu0 %v1447
    %1453 = vmatprep.subr.bf16.mxu0 0
    %1454 = vmatpush1.bf16.xpose.msra.mxu0 0
    %1455 = vmatprep.subr.bf16.mxu0 0
    %1456 = vmatpush1.bf16.xpose.msra.mxu0 0
    %1457 = vmatprep.subr.bf16.mxu0 0
    %1458 = vmatpush1.bf16.xpose.msra.mxu0 0
    %1459 = vmatprep.subr.bf16.mxu0 0
    %1460 = vmatpush1.bf16.xpose.msra.mxu0 0
    %1461 = vmatprep.subr.bf16.mxu0 0
    %1462 = vmatpush1.bf16.xpose.msra.mxu0 0
    %1463 = vmatprep.subr.bf16.mxu0 0
    %1464 = vmatpush1.bf16.xpose.msra.mxu0 0
    %1465 = vmatprep.subr.bf16.mxu0 0
    %1466 = vmatpush1.bf16.xpose.msra.mxu0 0
    %1467 = vmatprep.subr.bf16.mxu0 0
    %1468 = vmatpush1.bf16.xpose.msra.mxu0 0
    %1469 = vmatprep.subr.bf16.mxu0 0
    %1470 = vmatpush1.bf16.xpose.msra.mxu0 0
    %1471 = vmatprep.subr.bf16.mxu0 0
    %1472 = vmatpush1.bf16.xpose.msra.mxu0 0
    %1473 = vmatprep.subr.bf16.mxu0 0
    %1474 = vmatpush1.bf16.xpose.msra.mxu0 0
    %1475 = vmatprep.subr.bf16.mxu0 0
    %1476 = vmatpush1.bf16.xpose.msra.mxu0 0
    %1477 = vmatprep.subr.bf16.mxu0 0
    %1478 = vmatpush1.bf16.xpose.msra.mxu0 0
    %1479 = vmatprep.subr.bf16.mxu0 0
    %1480 = vmatpush1.bf16.xpose.msra.mxu0 0
    %1481 = vmatprep.mubr.bf16.mxu0 0
    %1482 = vmatmul.mubr.bf16.gmra.mrb[0].mxu0 %v1441
    %v1483 = vpop.f32.mrb[0].mxu0
    %v1484 = vadd.f32 %v96, %v1483
    %v1485 = vpop.f32.mrb[0].mxu0
    %v1486 = vpop.f32.mrb[0].mxu0
    %v1487 = vadd.f32 %v97, %v1486
    %v1488 = vpop.f32.mrb[0].mxu0
    %1489 = vdwg.mxu0
    %v1490 = vsel %vm135, %v1484, -inf
    %1491 = vmax.xlane.f32.xlu0 %v1490
    %v1492 = vpop.xlane.xlu0 %1491
    %v1493 = vsel %vm135, %v1487, -inf
    %1494 = vmax.xlane.f32.xlu0 %v1493
    %v1495 = vpop.xlane.xlu0 %1494
    %v1496 = vsub.f32 %v1484, %v1492
    %v1497 = vsub.f32 %v1487, %v1495
    %v1498 = vmul.f32 %v1496, 1.442695
    %v1499 = vpow.pop %v1498
    %v1500 = vmul.f32 %v1497, 1.442695
    %v1501 = vpow.pop %v1500
    %v1502 = vsel %vm135, %v1499, 0.0
    %1503 = vadd.xlane.f32.xlu0 %v1502
    %v1504 = vpop.xlane.xlu0 %1503
    %v1505 = vsel %vm135, %v1501, 0.0
    %1506 = vadd.xlane.f32.xlu0 %v1505
    %v1507 = vpop.xlane.xlu0 %1506
    %v1508 = vrcp.pop %v1504
    %v1509 = vrcp.pop %v1507
    %v1510 = vmul.f32 %v1499, %v1508
    %v1511 = vmul.f32 %v1501, %v1509
    %v1512 = vpack.c.bf16 %v1511, %v1510
    %1513 = vrot.lane.b32.xlu0 %v273, 112
    %v1514 = vpop.permute.xlu0 %1513
    %1515 = vrot.lane.b32.xlu0 %v274, 112
    %v1516 = vpop.permute.xlu0 %1515
    %v1520 = vsel %vm135, %v1512, 0
    %1522 = vmatprep.subr.bf16.mxu0 0
    %1523 = vmatpush1.bf16.msra.mxu0 %v1514
    %1524 = vmatprep.subr.bf16.mxu0 0
    %1525 = vmatpush1.bf16.msra.mxu0 %v1516
    %1526 = vmatprep.subr.bf16.mxu0 0
    %1527 = vmatpush1.bf16.msra.mxu0 0
    %1528 = vmatprep.subr.bf16.mxu0 0
    %1529 = vmatpush1.bf16.msra.mxu0 0
    %1530 = vmatprep.subr.bf16.mxu0 0
    %1531 = vmatpush1.bf16.msra.mxu0 0
    %1532 = vmatprep.subr.bf16.mxu0 0
    %1533 = vmatpush1.bf16.msra.mxu0 0
    %1534 = vmatprep.subr.bf16.mxu0 0
    %1535 = vmatpush1.bf16.msra.mxu0 0
    %1536 = vmatprep.subr.bf16.mxu0 0
    %1537 = vmatpush1.bf16.msra.mxu0 0
    %1538 = vmatprep.subr.bf16.mxu0 0
    %1539 = vmatpush1.bf16.msra.mxu0 0
    %1540 = vmatprep.subr.bf16.mxu0 0
    %1541 = vmatpush1.bf16.msra.mxu0 0
    %1542 = vmatprep.subr.bf16.mxu0 0
    %1543 = vmatpush1.bf16.msra.mxu0 0
    %1544 = vmatprep.subr.bf16.mxu0 0
    %1545 = vmatpush1.bf16.msra.mxu0 0
    %1546 = vmatprep.subr.bf16.mxu0 0
    %1547 = vmatpush1.bf16.msra.mxu0 0
    %1548 = vmatprep.subr.bf16.mxu0 0
    %1549 = vmatpush1.bf16.msra.mxu0 0
    %1550 = vmatprep.subr.bf16.mxu0 0
    %1551 = vmatpush1.bf16.msra.mxu0 0
    %1552 = vmatprep.subr.bf16.mxu0 0
    %1553 = vmatpush1.bf16.msra.mxu0 0
    %1554 = vmatprep.mubr.bf16.mxu0 0
    %1555 = vmatmul.mubr.bf16.gmra.mrb[0].mxu0 %v1520
    %v1556 = vpop.f32.mrb[0].mxu0
    %v1557 = vadd.f32 0.0, %v1556
    %v1558 = vpop.f32.mrb[0].mxu0
    %v1559 = vpop.f32.mrb[0].mxu0
    %v1560 = vadd.f32 0.0, %v1559
    %v1561 = vpop.f32.mrb[0].mxu0
    %1562 = vdwg.mxu0
    %1563 = vrot.lane.b32.xlu0 %v1182, 104
    %v1564 = vpop.permute.xlu0 %1563
    %1565 = vrot.lane.b32.xlu0 %v191, 104
    %v1566 = vpop.permute.xlu0 %1565
    %1567 = vrot.lane.b32.xlu0 %v192, 104
    %v1568 = vpop.permute.xlu0 %1567
    %v1570 = vsel %vm488, %v1564, 0
    %v1573 = vsel %vm488, %v1566, 0
    %v1576 = vsel %vm488, %v1568, 0
    %1578 = vmatprep.subr.bf16.mxu0 0
    %1579 = vmatpush1.bf16.xpose.msra.mxu0 %v1573
    %1580 = vmatprep.subr.bf16.mxu0 0
    %1581 = vmatpush1.bf16.xpose.msra.mxu0 %v1576
    %1582 = vmatprep.subr.bf16.mxu0 0
    %1583 = vmatpush1.bf16.xpose.msra.mxu0 0
    %1584 = vmatprep.subr.bf16.mxu0 0
    %1585 = vmatpush1.bf16.xpose.msra.mxu0 0
    %1586 = vmatprep.subr.bf16.mxu0 0
    %1587 = vmatpush1.bf16.xpose.msra.mxu0 0
    %1588 = vmatprep.subr.bf16.mxu0 0
    %1589 = vmatpush1.bf16.xpose.msra.mxu0 0
    %1590 = vmatprep.subr.bf16.mxu0 0
    %1591 = vmatpush1.bf16.xpose.msra.mxu0 0
    %1592 = vmatprep.subr.bf16.mxu0 0
    %1593 = vmatpush1.bf16.xpose.msra.mxu0 0
    %1594 = vmatprep.subr.bf16.mxu0 0
    %1595 = vmatpush1.bf16.xpose.msra.mxu0 0
    %1596 = vmatprep.subr.bf16.mxu0 0
    %1597 = vmatpush1.bf16.xpose.msra.mxu0 0
    %1598 = vmatprep.subr.bf16.mxu0 0
    %1599 = vmatpush1.bf16.xpose.msra.mxu0 0
    %1600 = vmatprep.subr.bf16.mxu0 0
    %1601 = vmatpush1.bf16.xpose.msra.mxu0 0
    %1602 = vmatprep.subr.bf16.mxu0 0
    %1603 = vmatpush1.bf16.xpose.msra.mxu0 0
    %1604 = vmatprep.subr.bf16.mxu0 0
    %1605 = vmatpush1.bf16.xpose.msra.mxu0 0
    %1606 = vmatprep.subr.bf16.mxu0 0
    %1607 = vmatpush1.bf16.xpose.msra.mxu0 0
    %1608 = vmatprep.subr.bf16.mxu0 0
    %1609 = vmatpush1.bf16.xpose.msra.mxu0 0
    %1610 = vmatprep.mubr.bf16.mxu0 0
    %1611 = vmatmul.mubr.bf16.gmra.mrb[0].mxu0 %v1570
    %v1612 = vpop.f32.mrb[0].mxu0
    %v1613 = vadd.f32 %v96, %v1612
    %v1614 = vpop.f32.mrb[0].mxu0
    %v1615 = vpop.f32.mrb[0].mxu0
    %v1616 = vadd.f32 %v97, %v1615
    %v1617 = vpop.f32.mrb[0].mxu0
    %1618 = vdwg.mxu0
    %v1619 = vsel %vm135, %v1613, -inf
    %1620 = vmax.xlane.f32.xlu0 %v1619
    %v1621 = vpop.xlane.xlu0 %1620
    %v1622 = vsel %vm135, %v1616, -inf
    %1623 = vmax.xlane.f32.xlu0 %v1622
    %v1624 = vpop.xlane.xlu0 %1623
    %v1625 = vsub.f32 %v1613, %v1621
    %v1626 = vsub.f32 %v1616, %v1624
    %v1627 = vmul.f32 %v1625, 1.442695
    %v1628 = vpow.pop %v1627
    %v1629 = vmul.f32 %v1626, 1.442695
    %v1630 = vpow.pop %v1629
    %v1631 = vsel %vm135, %v1628, 0.0
    %1632 = vadd.xlane.f32.xlu0 %v1631
    %v1633 = vpop.xlane.xlu0 %1632
    %v1634 = vsel %vm135, %v1630, 0.0
    %1635 = vadd.xlane.f32.xlu0 %v1634
    %v1636 = vpop.xlane.xlu0 %1635
    %v1637 = vrcp.pop %v1633
    %v1638 = vrcp.pop %v1636
    %v1639 = vmul.f32 %v1628, %v1637
    %v1640 = vmul.f32 %v1630, %v1638
    %v1641 = vpack.c.bf16 %v1640, %v1639
    %1642 = vrot.lane.b32.xlu0 %v273, 104
    %v1643 = vpop.permute.xlu0 %1642
    %1644 = vrot.lane.b32.xlu0 %v274, 104
    %v1645 = vpop.permute.xlu0 %1644
    %v1649 = vsel %vm135, %v1641, 0
    %1651 = vmatprep.subr.bf16.mxu0 0
    %1652 = vmatpush1.bf16.msra.mxu0 %v1643
    %1653 = vmatprep.subr.bf16.mxu0 0
    %1654 = vmatpush1.bf16.msra.mxu0 %v1645
    %1655 = vmatprep.subr.bf16.mxu0 0
    %1656 = vmatpush1.bf16.msra.mxu0 0
    %1657 = vmatprep.subr.bf16.mxu0 0
    %1658 = vmatpush1.bf16.msra.mxu0 0
    %1659 = vmatprep.subr.bf16.mxu0 0
    %1660 = vmatpush1.bf16.msra.mxu0 0
    %1661 = vmatprep.subr.bf16.mxu0 0
    %1662 = vmatpush1.bf16.msra.mxu0 0
    %1663 = vmatprep.subr.bf16.mxu0 0
    %1664 = vmatpush1.bf16.msra.mxu0 0
    %1665 = vmatprep.subr.bf16.mxu0 0
    %1666 = vmatpush1.bf16.msra.mxu0 0
    %1667 = vmatprep.subr.bf16.mxu0 0
    %1668 = vmatpush1.bf16.msra.mxu0 0
    %1669 = vmatprep.subr.bf16.mxu0 0
    %1670 = vmatpush1.bf16.msra.mxu0 0
    %1671 = vmatprep.subr.bf16.mxu0 0
    %1672 = vmatpush1.bf16.msra.mxu0 0
    %1673 = vmatprep.subr.bf16.mxu0 0
    %1674 = vmatpush1.bf16.msra.mxu0 0
    %1675 = vmatprep.subr.bf16.mxu0 0
    %1676 = vmatpush1.bf16.msra.mxu0 0
    %1677 = vmatprep.subr.bf16.mxu0 0
    %1678 = vmatpush1.bf16.msra.mxu0 0
    %1679 = vmatprep.subr.bf16.mxu0 0
    %1680 = vmatpush1.bf16.msra.mxu0 0
    %1681 = vmatprep.subr.bf16.mxu0 0
    %1682 = vmatpush1.bf16.msra.mxu0 0
    %1683 = vmatprep.mubr.bf16.mxu0 0
    %1684 = vmatmul.mubr.bf16.gmra.mrb[0].mxu0 %v1649
    %v1685 = vpop.f32.mrb[0].mxu0
    %v1686 = vadd.f32 0.0, %v1685
    %v1687 = vpop.f32.mrb[0].mxu0
    %v1688 = vpop.f32.mrb[0].mxu0
    %v1689 = vadd.f32 0.0, %v1688
    %v1690 = vpop.f32.mrb[0].mxu0
    %1691 = vdwg.mxu0
    %1694 = vrot.lane.b32.xlu0 %v1428, 8
    %v1695 = vpop.permute.xlu0 %1694
    %1696 = vrot.lane.b32.xlu0 %v1431, 8
    %v1697 = vpop.permute.xlu0 %1696
    %1702 = vrot.lane.b32.xlu0 %v1557, 16
    %v1703 = vpop.permute.xlu0 %1702
    %1704 = vrot.lane.b32.xlu0 %v1560, 16
    %v1705 = vpop.permute.xlu0 %1704
    %1710 = vrot.lane.b32.xlu0 %v1686, 24
    %v1711 = vpop.permute.xlu0 %1710
    %1712 = vrot.lane.b32.xlu0 %v1689, 24
    %v1713 = vpop.permute.xlu0 %1712
    %v1716 = vsel %vm488, %v1294, %v1695
    %v1717 = vsel %vm488, %v1297, %v1697
    %v1718 = vsel %vm536, %v1716, %v1703
    %v1719 = vsel %vm536, %v1717, %v1705
    %v1720 = vsel %vm998, %v1718, %v1711
    %v1721 = vsel %vm998, %v1719, %v1713
    %v1722 = vpack.c.bf16 %v1721, %v1720
    %v1723 = vld [vmem:[%s20] sm:$0xf]
    %v1724 = vld [vmem:[%s20 + $0x4] sm:$0xf]
    %v1725 = vld [vmem:[%s20 + $0x8] sm:$0xf]
    %v1726 = vld [vmem:[%s20 + $0xc] sm:$0xf]
    %v1727 = vld [vmem:[%s21] sm:$0x1]
    %v1729 = vlaneseq
    %v1730 = vshrl.u32 %v1729, 7
    %v1731 = vsub.s32 0, %v1730
    %v1732 = vrot.slane %v1727, %v1731
    %v1738 = vunpack.c.l.b16 %v1723
    %v1739 = vunpack.c.l.b16 %v1724
    %v1740 = vunpack.c.l.b16 %v1725
    %v1741 = vunpack.c.l.b16 %v1726
    %v1742 = vpack.c.b16 %v1739, %v1738
    %v1743 = vpack.c.b16 %v1741, %v1740
    %v1747 = vsel %vm135, %v1722, 0
    %1749 = vmatprep.subr.bf16.mxu0 0
    %1750 = vmatpush1.bf16.msra.mxu0 %v1742
    %1751 = vmatprep.subr.bf16.mxu0 0
    %1752 = vmatpush1.bf16.msra.mxu0 %v1743
    %1753 = vmatprep.subr.bf16.mxu0 0
    %1754 = vmatpush1.bf16.msra.mxu0 0
    %1755 = vmatprep.subr.bf16.mxu0 0
    %1756 = vmatpush1.bf16.msra.mxu0 0
    %1757 = vmatprep.subr.bf16.mxu0 0
    %1758 = vmatpush1.bf16.msra.mxu0 0
    %1759 = vmatprep.subr.bf16.mxu0 0
    %1760 = vmatpush1.bf16.msra.mxu0 0
    %1761 = vmatprep.subr.bf16.mxu0 0
    %1762 = vmatpush1.bf16.msra.mxu0 0
    %1763 = vmatprep.subr.bf16.mxu0 0
    %1764 = vmatpush1.bf16.msra.mxu0 0
    %1765 = vmatprep.subr.bf16.mxu0 0
    %1766 = vmatpush1.bf16.msra.mxu0 0
    %1767 = vmatprep.subr.bf16.mxu0 0
    %1768 = vmatpush1.bf16.msra.mxu0 0
    %1769 = vmatprep.subr.bf16.mxu0 0
    %1770 = vmatpush1.bf16.msra.mxu0 0
    %1771 = vmatprep.subr.bf16.mxu0 0
    %1772 = vmatpush1.bf16.msra.mxu0 0
    %1773 = vmatprep.subr.bf16.mxu0 0
    %1774 = vmatpush1.bf16.msra.mxu0 0
    %1775 = vmatprep.subr.bf16.mxu0 0
    %1776 = vmatpush1.bf16.msra.mxu0 0
    %1777 = vmatprep.subr.bf16.mxu0 0
    %1778 = vmatpush1.bf16.msra.mxu0 0
    %1779 = vmatprep.subr.bf16.mxu0 0
    %1780 = vmatpush1.bf16.msra.mxu0 0
    %1781 = vmatprep.mubr.bf16.mxu0 0
    %1782 = vmatmul.mubr.bf16.gmra.mrb[0].mxu0 %v1747
    %v1783 = vpop.f32.mrb[0].mxu0
    %v1784 = vadd.f32 %v1732, %v1783
    %v1785 = vpop.f32.mrb[0].mxu0
    %v1786 = vpop.f32.mrb[0].mxu0
    %v1787 = vadd.f32 %v1732, %v1786
    %v1788 = vpop.f32.mrb[0].mxu0
    %1789 = vdwg.mxu0
    %v1790 = vadd.f32 %v1110, %v1784
    %v1791 = vadd.f32 %v1111, %v1787
    %v1792 = vld [vmem:[%s26 + $0x1] sm:$0x1]
    %v1793 = vld [vmem:[%s27 + $0x1] sm:$0x1]
    %v1794 = vsel %vm135, %v1790, 0.0
    %1795 = vadd.xlane.f32.xlu0 %v1794
    %v1796 = vpop.xlane.xlu0 %1795
    %v1797 = vsel %vm135, %v1791, 0.0
    %1798 = vadd.xlane.f32.xlu0 %v1797
    %v1799 = vpop.xlane.xlu0 %1798
    %v1800 = vmul.f32 %v1796, %v1079
    %v1801 = vmul.f32 %v1799, %v1079
    %v1802 = vsub.f32 %v1790, %v1800
    %v1803 = vsub.f32 %v1791, %v1801
    %v1804 = vmul.f32 %v1802, %v1802
    %v1805 = vmul.f32 %v1803, %v1803
    %v1806 = vsel %vm135, %v1804, 0.0
    %1807 = vadd.xlane.f32.xlu0 %v1806
    %v1808 = vpop.xlane.xlu0 %1807
    %v1809 = vsel %vm135, %v1805, 0.0
    %1810 = vadd.xlane.f32.xlu0 %v1809
    %v1811 = vpop.xlane.xlu0 %1810
    %v1812 = vmul.f32 %v1808, %v1079
    %v1813 = vmul.f32 %v1811, %v1079
    %v1814 = vadd.f32 %v1812, 1e-05
    %v1815 = vadd.f32 %v1813, 1e-05
    %v1816 = vrsqrt.pop %v1814
    %v1817 = vrsqrt.pop %v1815
    %v1818 = vmul.f32 %v1802, %v1816
    %v1819 = vmul.f32 %v1803, %v1817
    %v1820 = vlaneseq
    %v1821 = vshrl.u32 %v1820, 7
    %v1822 = vsub.s32 0, %v1821
    %v1823 = vrot.slane %v1792, %v1822
    %v1824 = vmul.f32 %v1818, %v1823
    %v1825 = vmul.f32 %v1819, %v1823
    %v1826 = vlaneseq
    %v1827 = vshrl.u32 %v1826, 7
    %v1828 = vsub.s32 0, %v1827
    %v1829 = vrot.slane %v1793, %v1828
    %v1830 = vadd.f32 %v1824, %v1829
    %v1831 = vadd.f32 %v1825, %v1829
    %v1832 = vpack.c.bf16 %v1831, %v1830
    %v1833 = vld [vmem:[%s22] sm:$0xf]
    %v1834 = vld [vmem:[%s22 + $0x4] sm:$0xf]
    %v1835 = vld [vmem:[%s22 + $0x8] sm:$0xf]
    %v1836 = vld [vmem:[%s22 + $0xc] sm:$0xf]
    %v1837 = vld [vmem:[%s23] sm:$0x1]
    %v1839 = vlaneseq
    %v1840 = vshrl.u32 %v1839, 7
    %v1841 = vsub.s32 0, %v1840
    %v1842 = vrot.slane %v1837, %v1841
    %v1848 = vunpack.c.l.b16 %v1833
    %v1849 = vunpack.c.l.b16 %v1834
    %v1850 = vunpack.c.l.b16 %v1835
    %v1851 = vunpack.c.l.b16 %v1836
    %v1852 = vpack.c.b16 %v1849, %v1848
    %v1853 = vpack.c.b16 %v1851, %v1850
    %v1857 = vsel %vm135, %v1832, 0
    %1859 = vmatprep.subr.bf16.mxu0 0
    %1860 = vmatpush1.bf16.msra.mxu0 %v1852
    %1861 = vmatprep.subr.bf16.mxu0 0
    %1862 = vmatpush1.bf16.msra.mxu0 %v1853
    %1863 = vmatprep.subr.bf16.mxu0 0
    %1864 = vmatpush1.bf16.msra.mxu0 0
    %1865 = vmatprep.subr.bf16.mxu0 0
    %1866 = vmatpush1.bf16.msra.mxu0 0
    %1867 = vmatprep.subr.bf16.mxu0 0
    %1868 = vmatpush1.bf16.msra.mxu0 0
    %1869 = vmatprep.subr.bf16.mxu0 0
    %1870 = vmatpush1.bf16.msra.mxu0 0
    %1871 = vmatprep.subr.bf16.mxu0 0
    %1872 = vmatpush1.bf16.msra.mxu0 0
    %1873 = vmatprep.subr.bf16.mxu0 0
    %1874 = vmatpush1.bf16.msra.mxu0 0
    %1875 = vmatprep.subr.bf16.mxu0 0
    %1876 = vmatpush1.bf16.msra.mxu0 0
    %1877 = vmatprep.subr.bf16.mxu0 0
    %1878 = vmatpush1.bf16.msra.mxu0 0
    %1879 = vmatprep.subr.bf16.mxu0 0
    %1880 = vmatpush1.bf16.msra.mxu0 0
    %1881 = vmatprep.subr.bf16.mxu0 0
    %1882 = vmatpush1.bf16.msra.mxu0 0
    %1883 = vmatprep.subr.bf16.mxu0 0
    %1884 = vmatpush1.bf16.msra.mxu0 0
    %1885 = vmatprep.subr.bf16.mxu0 0
    %1886 = vmatpush1.bf16.msra.mxu0 0
    %1887 = vmatprep.subr.bf16.mxu0 0
    %1888 = vmatpush1.bf16.msra.mxu0 0
    %1889 = vmatprep.subr.bf16.mxu0 0
    %1890 = vmatpush1.bf16.msra.mxu0 0
    %1891 = vmatprep.mubr.bf16.mxu0 0
    %1892 = vmatmul.mubr.bf16.gmra.mrb[0].mxu0 %v1857
    %v1893 = vpop.f32.mrb[0].mxu0
    %v1894 = vadd.f32 %v1842, %v1893
    %v1895 = vpop.f32.mrb[0].mxu0
    %v1896 = vpop.f32.mrb[0].mxu0
    %v1897 = vadd.f32 %v1842, %v1896
    %v1898 = vpop.f32.mrb[0].mxu0
    %1899 = vdwg.mxu0
    %v1900 = vmax.f32 %v1894, 0.0
    %v1901 = vmax.f32 %v1897, 0.0
    %v1902 = vpack.c.bf16 %v1901, %v1900
    %v1903 = vld [vmem:[%s24] sm:$0xf]
    %v1904 = vld [vmem:[%s24 + $0x4] sm:$0xf]
    %v1905 = vld [vmem:[%s24 + $0x8] sm:$0xf]
    %v1906 = vld [vmem:[%s24 + $0xc] sm:$0xf]
    %v1907 = vld [vmem:[%s24 + $0x10] sm:$0xf]
    %v1908 = vld [vmem:[%s24 + $0x14] sm:$0xf]
    %v1909 = vld [vmem:[%s24 + $0x18] sm:$0xf]
    %v1910 = vld [vmem:[%s24 + $0x1c] sm:$0xf]
    %v1911 = vld [vmem:[%s25] sm:$0x1]
    %v1913 = vlaneseq
    %v1914 = vshrl.u32 %v1913, 7
    %v1915 = vsub.s32 0, %v1914
    %v1916 = vrot.slane %v1911, %v1915
    %v1926 = vunpack.c.l.b16 %v1903
    %v1927 = vunpack.c.l.b16 %v1904
    %v1928 = vunpack.c.l.b16 %v1905
    %v1929 = vunpack.c.l.b16 %v1906
    %v1930 = vunpack.c.l.b16 %v1907
    %v1931 = vunpack.c.l.b16 %v1908
    %v1932 = vunpack.c.l.b16 %v1909
    %v1933 = vunpack.c.l.b16 %v1910
    %v1934 = vpack.c.b16 %v1927, %v1926
    %v1935 = vpack.c.b16 %v1929, %v1928
    %v1936 = vpack.c.b16 %v1931, %v1930
    %v1937 = vpack.c.b16 %v1933, %v1932
    %vm1942 = vcmask 523264
    %v1944 = vsel %vm1942, %v1902, 0
    %1946 = vmatprep.subr.bf16.mxu0 0
    %1947 = vmatpush1.bf16.msra.mxu0 %v1934
    %1948 = vmatprep.subr.bf16.mxu0 0
    %1949 = vmatpush1.bf16.msra.mxu0 %v1935
    %1950 = vmatprep.subr.bf16.mxu0 0
    %1951 = vmatpush1.bf16.msra.mxu0 %v1936
    %1952 = vmatprep.subr.bf16.mxu0 0
    %1953 = vmatpush1.bf16.msra.mxu0 %v1937
    %1954 = vmatprep.subr.bf16.mxu0 0
    %1955 = vmatpush1.bf16.msra.mxu0 0
    %1956 = vmatprep.subr.bf16.mxu0 0
    %1957 = vmatpush1.bf16.msra.mxu0 0
    %1958 = vmatprep.subr.bf16.mxu0 0
    %1959 = vmatpush1.bf16.msra.mxu0 0
    %1960 = vmatprep.subr.bf16.mxu0 0
    %1961 = vmatpush1.bf16.msra.mxu0 0
    %1962 = vmatprep.subr.bf16.mxu0 0
    %1963 = vmatpush1.bf16.msra.mxu0 0
    %1964 = vmatprep.subr.bf16.mxu0 0
    %1965 = vmatpush1.bf16.msra.mxu0 0
    %1966 = vmatprep.subr.bf16.mxu0 0
    %1967 = vmatpush1.bf16.msra.mxu0 0
    %1968 = vmatprep.subr.bf16.mxu0 0
    %1969 = vmatpush1.bf16.msra.mxu0 0
    %1970 = vmatprep.subr.bf16.mxu0 0
    %1971 = vmatpush1.bf16.msra.mxu0 0
    %1972 = vmatprep.subr.bf16.mxu0 0
    %1973 = vmatpush1.bf16.msra.mxu0 0
    %1974 = vmatprep.subr.bf16.mxu0 0
    %1975 = vmatpush1.bf16.msra.mxu0 0
    %1976 = vmatprep.subr.bf16.mxu0 0
    %1977 = vmatpush1.bf16.msra.mxu0 0
    %1978 = vmatprep.mubr.bf16.mxu0 0
    %1979 = vmatmul.mubr.bf16.gmra.mrb[0].mxu0 %v1944
    %v1980 = vpop.f32.mrb[0].mxu0
    %v1981 = vadd.f32 %v1916, %v1980
    %v1982 = vpop.f32.mrb[0].mxu0
    %v1983 = vpop.f32.mrb[0].mxu0
    %v1984 = vadd.f32 %v1916, %v1983
    %v1985 = vpop.f32.mrb[0].mxu0
    %1986 = vdwg.mxu0
    %v1987 = vadd.f32 %v1830, %v1981
    %v1988 = vadd.f32 %v1831, %v1984
    %v1989 = vld [vmem:[%s26 + $0x2] sm:$0x1]
    %v1990 = vld [vmem:[%s27 + $0x2] sm:$0x1]
    %v1991 = vsel %vm135, %v1987, 0.0
    %1992 = vadd.xlane.f32.xlu0 %v1991
    %v1993 = vpop.xlane.xlu0 %1992
    %v1994 = vsel %vm135, %v1988, 0.0
    %1995 = vadd.xlane.f32.xlu0 %v1994
    %v1996 = vpop.xlane.xlu0 %1995
    %v1997 = vmul.f32 %v1993, %v1079
    %v1998 = vmul.f32 %v1996, %v1079
    %v1999 = vsub.f32 %v1987, %v1997
    %v2000 = vsub.f32 %v1988, %v1998
    %v2001 = vmul.f32 %v1999, %v1999
    %v2002 = vmul.f32 %v2000, %v2000
    %v2003 = vsel %vm135, %v2001, 0.0
    %2004 = vadd.xlane.f32.xlu0 %v2003
    %v2005 = vpop.xlane.xlu0 %2004
    %v2006 = vsel %vm135, %v2002, 0.0
    %2007 = vadd.xlane.f32.xlu0 %v2006
    %v2008 = vpop.xlane.xlu0 %2007
    %v2009 = vmul.f32 %v2005, %v1079
    %v2010 = vmul.f32 %v2008, %v1079
    %v2011 = vadd.f32 %v2009, 1e-05
    %v2012 = vadd.f32 %v2010, 1e-05
    %v2013 = vrsqrt.pop %v2011
    %v2014 = vrsqrt.pop %v2012
    %v2015 = vmul.f32 %v1999, %v2013
    %v2016 = vmul.f32 %v2000, %v2014
    %v2017 = vlaneseq
    %v2018 = vshrl.u32 %v2017, 7
    %v2019 = vsub.s32 0, %v2018
    %v2020 = vrot.slane %v1989, %v2019
    %v2021 = vmul.f32 %v2015, %v2020
    %v2022 = vmul.f32 %v2016, %v2020
    %v2023 = vlaneseq
    %v2024 = vshrl.u32 %v2023, 7
    %v2025 = vsub.s32 0, %v2024
    %v2026 = vrot.slane %v1990, %v2025
    %v2027 = vadd.f32 %v2021, %v2026
    %v2028 = vadd.f32 %v2022, %v2026
  $region118: #{transformer_decoder.1} parent=0 // loop_footer
    %s280 = sadd.s32 1, %s276
  $region119: #{transformer_decoder.1} parent=0 // loop_footer_branch
    %275 = sbr.rel target = $region115
  $region120: #{transformer_decoder.1} parent=0 // loop_exit
    _
  %v2029 = vld [vmem:[%s26 + $0x3] sm:$0x1]
  %v2030 = vld [vmem:[%s27 + $0x3] sm:$0x1]
  %v2031 = vsel %vm135, %v281, 0.0
  %2032 = vadd.xlane.f32.xlu0 %v2031
  %v2033 = vpop.xlane.xlu0 %2032
  %v2034 = vsel %vm135, %v282, 0.0
  %2035 = vadd.xlane.f32.xlu0 %v2034
  %v2036 = vpop.xlane.xlu0 %2035
  %v2037 = vrcp.pop 32.0
  %v2038 = vmul.f32 %v2033, %v2037
  %v2039 = vmul.f32 %v2036, %v2037
  %v2040 = vsub.f32 %v281, %v2038
  %v2041 = vsub.f32 %v282, %v2039
  %v2042 = vmul.f32 %v2040, %v2040
  %v2043 = vmul.f32 %v2041, %v2041
  %v2044 = vsel %vm135, %v2042, 0.0
  %2045 = vadd.xlane.f32.xlu0 %v2044
  %v2046 = vpop.xlane.xlu0 %2045
  %v2047 = vsel %vm135, %v2043, 0.0
  %2048 = vadd.xlane.f32.xlu0 %v2047
  %v2049 = vpop.xlane.xlu0 %2048
  %v2050 = vmul.f32 %v2046, %v2037
  %v2051 = vmul.f32 %v2049, %v2037
  %v2052 = vadd.f32 %v2050, 1e-05
  %v2053 = vadd.f32 %v2051, 1e-05
  %v2054 = vrsqrt.pop %v2052
  %v2055 = vrsqrt.pop %v2053
  %v2056 = vmul.f32 %v2040, %v2054
  %v2057 = vmul.f32 %v2041, %v2055
  %v2058 = vlaneseq
  %v2059 = vshrl.u32 %v2058, 7
  %v2060 = vsub.s32 0, %v2059
  %v2061 = vrot.slane %v2029, %v2060
  %v2062 = vmul.f32 %v2056, %v2061
  %v2063 = vmul.f32 %v2057, %v2061
  %v2064 = vlaneseq
  %v2065 = vshrl.u32 %v2064, 7
  %v2066 = vsub.s32 0, %v2065
  %v2067 = vrot.slane %v2030, %v2066
  %v2068 = vadd.f32 %v2062, %v2067
  %v2069 = vadd.f32 %v2063, %v2067
  %2070 = vst.msk [vmem:[%s28] sm:$0xff] %vm135, %v2068
  %2071 = vst.msk [vmem:[%s28 + $0x8] sm:$0xff] %vm135, %v2069
  // Predicated region
  $region121: #{transformer_decoder.1} parent=0 // pred_check
    _
  $region122: #{transformer_decoder.1} parent=0 // pred_check_branch
    %2073 = sbr.rel (0) target = $region124
  $region123: #{transformer_decoder.1} parent=0 // pred_region
    _
  $region124: #{transformer_decoder.1} parent=0 // pred_fallthru
    _
  // Predicated region
  $region125: #{transformer_decoder.1} parent=0 // pred_check
    _
  $region126: #{transformer_decoder.1} parent=0 // pred_check_branch
    %2075 = sbr.rel (0) target = $region128
  $region127: #{transformer_decoder.1} parent=0 // pred_region
    _
  $region128: #{transformer_decoder.1} parent=0 // pred_fallthru
    _

</llo_original>
